<compile_context>
chip_gen: v7x
topology: tpu7x:2x2x1
jax: 0.10.0
libtpu: 0.0.40
codegen_flags: <defaults>
</compile_context>

<pallas_src>
import functools

import jax
import jax.numpy as jnp
from jax.experimental import pallas as pl
from jax.experimental.pallas import tpu as pltpu


# ---------------------------------------------------------------------------
# Pallas kernel: whole forward pass (encoder LSTM, decoder LSTM, two linears)
# ---------------------------------------------------------------------------
def _lstmae_classifier_kernel(
    x_ref,            # (1, T*Bb, I)  time-major flattened batch block
    w_ih_e_ref,       # (I, 4H)   encoder input->gates (transposed)
    w_hh_e_ref,       # (H, 4H)   encoder hidden->gates (transposed)
    b_e_ref,          # (1, 4H)   encoder bias_ih + bias_hh
    w_ih_d_ref,       # (H, 4H)   decoder input->gates (transposed)
    w_hh_d_ref,       # (H, 4H)   decoder hidden->gates (transposed)
    b_d_ref,          # (1, 4H)   decoder bias_ih + bias_hh
    w_rec_bd_ref,     # (T*H, T*O) block-diagonal reconstruction weight
    b_rec_ref,        # (1, T*O)  reconstruction bias, tiled over time
    w_cls_ref,        # (H, 128)  classifier weight padded to 128 lanes
    b_cls_ref,        # (1, 128)  classifier bias padded to 128 lanes
    recon_ref,        # out: (1, Bb, T*O)   lane-dense reconstruction slab
    cls_ref,          # out: (1, Bb, 128)   lane-dense (padded) class logits
    *,
    T,
    Bb,
):
    x = x_ref[0].astype(jnp.float32)                 # (T*Bb, I)
    H = w_hh_e_ref.shape[0]

    w_hh_e = w_hh_e_ref[...]
    w_hh_d = w_hh_d_ref[...]

    # Hoisted lane mask for the cell-candidate (g) quadrant of the 4H-wide gates.
    lane = jax.lax.broadcasted_iota(jnp.int32, (Bb, 4 * H), 1)
    is_g = jnp.logical_and(lane >= 2 * H, lane < 3 * H)

    def activate(gates):
        # Single EUP pass per step: tanh(x) = 2*sigmoid(2x) - 1.
        # Pre-scale the g quadrant, one full-vreg sigmoid, VPU fix-up.
        gs = jnp.where(is_g, 2.0 * gates, gates)
        s = jax.nn.sigmoid(gs)
        return jnp.where(is_g, 2.0 * s - 1.0, s)

    def combine(act, c):
        i_g = act[:, 0 * H:1 * H]
        f_g = act[:, 1 * H:2 * H]
        g_g = act[:, 2 * H:3 * H]
        o_g = act[:, 3 * H:4 * H]
        c_new = f_g * c + i_g * g_g
        h_new = o_g * jnp.tanh(c_new)
        return h_new, c_new

    # ----- encoder: input projection hoisted out of the recurrence (one matmul) -----
    x_proj = (
        jnp.dot(x, w_ih_e_ref[...], preferred_element_type=jnp.float32)
        + b_e_ref[...]
    )                                                # (T*Bb, 4H)

    h = jnp.zeros((Bb, H), jnp.float32)
    c = jnp.zeros((Bb, H), jnp.float32)
    for t in range(T):                               # small static trip count -> unrolled
        gates = x_proj[t * Bb:(t + 1) * Bb, :] + jnp.dot(
            h, w_hh_e, preferred_element_type=jnp.float32)
        h, c = combine(activate(gates), c)
    enc_last = h                                     # (Bb, H) == last_hidden_states

    # ----- decoder: input (h_T) is loop-invariant -> project once -----
    dec_in = (
        jnp.dot(enc_last, w_ih_d_ref[...], preferred_element_type=jnp.float32)
        + b_d_ref[...]
    )
    hd = jnp.zeros((Bb, H), jnp.float32)
    cd = jnp.zeros((Bb, H), jnp.float32)
    dec_hs = []
    for t in range(T):
        gates = dec_in + jnp.dot(hd, w_hh_d, preferred_element_type=jnp.float32)
        hd, cd = combine(activate(gates), cd)
        dec_hs.append(hd)                            # no matmul inside the recurrence

    # ----- reconstruction fc: one post-loop block-diagonal matmul -----
    dec_h = jnp.concatenate(dec_hs, axis=-1)         # (Bb, T*H)
    recon = (
        jnp.dot(dec_h, w_rec_bd_ref[...], preferred_element_type=jnp.float32)
        + b_rec_ref[...]
    )                                                # (Bb, T*O) lane-dense slab
    recon_ref[0] = recon.astype(recon_ref.dtype)

    # ----- classifier on last encoder hidden state (padded to 128 lanes) -----
    cls = (
        jnp.dot(enc_last, w_cls_ref[...], preferred_element_type=jnp.float32)
        + b_cls_ref[...]
    )
    cls_ref[0] = cls.astype(cls_ref.dtype)


# ---------------------------------------------------------------------------
# Wrapper
# ---------------------------------------------------------------------------
_CLS_PAD = 128  # lane-dense classifier output width (sliced to 10 outside)


def _num_batch_blocks(batch):
    """2 batch blocks on v7x only when each core gets >= 8 batch sublanes."""
    try:
        kind = jax.devices()[0].device_kind.lower()
    except Exception:
        kind = ""
    two_core = ("v7" in kind) or ("7x" in kind)
    if two_core and batch >= 16 and batch % 2 == 0 and (batch // 2) % 8 == 0:
        return 2
    return 1


def _replicated_spec(shape):
    n = len(shape)
    return pl.BlockSpec(shape, lambda g, _n=n: (0,) * _n)


@functools.partial(jax.jit, static_argnames=("num_blocks",))
def _forward_impl(x, params, *, num_blocks):
    B, T, I = x.shape
    H = params["w_hh_e"].shape[0]
    O = params["w_rec"].shape[1]
    G = num_blocks
    Bb = B // G

    # time-major within each batch block, pre-flattened: (G, T*Bb, I)
    xg = (
        jnp.transpose(x, (1, 0, 2))                  # (T, B, I)
        .reshape(T, G, Bb, I)
        .transpose(1, 0, 2, 3)
        .reshape(G, T * Bb, I)
    )

    # block-diagonal reconstruction weight (T*H, T*O) and time-tiled bias (1, T*O)
    w_rec_bd = jnp.kron(jnp.eye(T, dtype=params["w_rec"].dtype), params["w_rec"])
    b_rec_t = jnp.tile(params["b_rec"], (1, T))

    # classifier padded to 128 lanes (unmasked, lane-dense store in the kernel)
    w_cls_p = jnp.zeros((H, _CLS_PAD), params["w_cls"].dtype).at[:, :10].set(params["w_cls"])
    b_cls_p = jnp.zeros((1, _CLS_PAD), params["b_cls"].dtype).at[:, :10].set(params["b_cls"])

    args = (
        xg,
        params["w_ih_e"], params["w_hh_e"], params["b_e"],
        params["w_ih_d"], params["w_hh_d"], params["b_d"],
        w_rec_bd, b_rec_t,
        w_cls_p, b_cls_p,
    )

    in_specs = [pl.BlockSpec((1, T * Bb, I), lambda g: (g, 0, 0))]
    in_specs += [_replicated_spec(a.shape) for a in args[1:]]

    out_shape = (
        jax.ShapeDtypeStruct((G, Bb, T * O), jnp.float32),
        jax.ShapeDtypeStruct((G, Bb, _CLS_PAD), jnp.float32),
    )
    out_specs = (
        pl.BlockSpec((1, Bb, T * O), lambda g: (g, 0, 0)),
        pl.BlockSpec((1, Bb, _CLS_PAD), lambda g: (g, 0, 0)),
    )

    kernel = functools.partial(_lstmae_classifier_kernel, T=T, Bb=Bb)

    recon_g, cls_g = pl.pallas_call(
        kernel,
        grid=(G,),
        out_shape=out_shape,
        in_specs=in_specs,
        out_specs=out_specs,
        compiler_params=pltpu.CompilerParams(dimension_semantics=("parallel",)),
    )(*args)

    recon = recon_g.reshape(B, T, O)
    cls = cls_g.reshape(B, _CLS_PAD)[:, :10]
    return recon, cls


def lstmae_classifier_forward(x, params):
    G = _num_batch_blocks(x.shape[0])
    return _forward_impl(x, params, num_blocks=G)


# ---------------------------------------------------------------------------
# Deterministic parameter construction (PyTorch layouts, then transposed)
# ---------------------------------------------------------------------------
def make_params(key, input_size, hidden_size, output_size):
    H = hidden_size
    bound = 1.0 / jnp.sqrt(jnp.float32(H))
    keys = jax.random.split(key, 12)

    def u(k, shape):
        return jax.random.uniform(k, shape, jnp.float32, -bound, bound)

    # PyTorch-shaped tensors
    w_ih_e = u(keys[0], (4 * H, input_size))
    w_hh_e = u(keys[1], (4 * H, H))
    b_ih_e = u(keys[2], (4 * H,))
    b_hh_e = u(keys[3], (4 * H,))
    w_ih_d = u(keys[4], (4 * H, H))
    w_hh_d = u(keys[5], (4 * H, H))
    b_ih_d = u(keys[6], (4 * H,))
    b_hh_d = u(keys[7], (4 * H,))
    w_rec = u(keys[8], (output_size, H))
    b_rec = u(keys[9], (output_size,))
    w_cls = u(keys[10], (10, H))
    b_cls = u(keys[11], (10,))

    # Kernel layout: transposed weights, combined/2-D biases
    return {
        "w_ih_e": w_ih_e.T, "w_hh_e": w_hh_e.T, "b_e": (b_ih_e + b_hh_e)[None, :],
        "w_ih_d": w_ih_d.T, "w_hh_d": w_hh_d.T, "b_d": (b_ih_d + b_hh_d)[None, :],
        "w_rec": w_rec.T, "b_rec": b_rec[None, :],
        "w_cls": w_cls.T, "b_cls": b_cls[None, :],
    }


# ---------------------------------------------------------------------------
# Pure-JAX reference (for correctness check)
# ---------------------------------------------------------------------------
def reference_forward(x, p):
    B, T, _ = x.shape
    H = p["w_hh_e"].shape[0]

    def step(x_t, h, c, w_ih, w_hh, b):
        g = x_t @ w_ih + h @ w_hh + b
        i = jax.nn.sigmoid(g[:, :H])
        f = jax.nn.sigmoid(g[:, H:2 * H])
        gg = jnp.tanh(g[:, 2 * H:3 * H])
        o = jax.nn.sigmoid(g[:, 3 * H:])
        c = f * c + i * gg
        return o * jnp.tanh(c), c

    h = jnp.zeros((B, H)); c = jnp.zeros((B, H))
    for t in range(T):
        h, c = step(x[:, t, :], h, c, p["w_ih_e"], p["w_hh_e"], p["b_e"])
    enc_last = h
    hd = jnp.zeros((B, H)); cd = jnp.zeros((B, H))
    outs = []
    for t in range(T):
        hd, cd = step(enc_last, hd, cd, p["w_ih_d"], p["w_hh_d"], p["b_d"])
        outs.append(hd)
    dec = jnp.stack(outs, axis=1)
    recon = dec @ p["w_rec"] + p["b_rec"]
    cls = enc_last @ p["w_cls"] + p["b_cls"]
    return recon, cls


if __name__ == "__main__":
    # small shapes implied by the module: (batch, sequence_size, input_size)
    B, T = 8, 8
    input_size, hidden_size, output_size = 16, 32, 16

    key = jax.random.PRNGKey(0)
    k_x, k_p = jax.random.split(key)
    x = jax.random.normal(k_x, (B, T, input_size), jnp.float32)
    params = make_params(k_p, input_size, hidden_size, output_size)

    recon, classes = lstmae_classifier_forward(x, params)
    recon, classes = jax.block_until_ready((recon, classes))

    recon_ref, classes_ref = reference_forward(x, params)
    assert recon.shape == (B, T, output_size)
    assert classes.shape == (B, 10)
    assert jnp.allclose(recon, recon_ref, atol=1e-4, rtol=1e-4)
    assert jnp.allclose(classes, classes_ref, atol=1e-4, rtol=1e-4)

    print("KERNEL_OK")
</pallas_src>

<mosaic_0001>
module attributes {stable_mosaic.version = 11 : i64} {
  func.func @_lstmae_classifier_kernel(%arg0: i32, %arg1: memref<1x64x16xf32, #tpu.memory_space<vmem>>, %arg2: memref<16x128xf32, #tpu.memory_space<vmem>>, %arg3: memref<32x128xf32, #tpu.memory_space<vmem>>, %arg4: memref<1x128xf32, #tpu.memory_space<vmem>>, %arg5: memref<32x128xf32, #tpu.memory_space<vmem>>, %arg6: memref<32x128xf32, #tpu.memory_space<vmem>>, %arg7: memref<1x128xf32, #tpu.memory_space<vmem>>, %arg8: memref<256x128xf32, #tpu.memory_space<vmem>>, %arg9: memref<1x128xf32, #tpu.memory_space<vmem>>, %arg10: memref<32x128xf32, #tpu.memory_space<vmem>>, %arg11: memref<1x128xf32, #tpu.memory_space<vmem>>, %arg12: memref<1x8x128xf32, #tpu.memory_space<vmem>>, %arg13: memref<1x8x128xf32, #tpu.memory_space<vmem>>) attributes {dimension_semantics = [#tpu.dimension_semantics<parallel>], iteration_bounds = array<i64: 1>, scalar_prefetch = 0 : i64, scratch_operands = 0 : i64, tpu.core_type = #tpu.core_type<tc>, window_params = [{transform_indices = @transform_0, window_bounds = array<i64: 1, 64, 16>}, {pipeline_mode = #tpu.pipeline_mode<synchronous>, transform_indices = @transform_1, window_bounds = array<i64: 16, 128>}, {pipeline_mode = #tpu.pipeline_mode<synchronous>, transform_indices = @transform_2, window_bounds = array<i64: 32, 128>}, {pipeline_mode = #tpu.pipeline_mode<synchronous>, transform_indices = @transform_3, window_bounds = array<i64: 1, 128>}, {pipeline_mode = #tpu.pipeline_mode<synchronous>, transform_indices = @transform_4, window_bounds = array<i64: 32, 128>}, {pipeline_mode = #tpu.pipeline_mode<synchronous>, transform_indices = @transform_5, window_bounds = array<i64: 32, 128>}, {pipeline_mode = #tpu.pipeline_mode<synchronous>, transform_indices = @transform_6, window_bounds = array<i64: 1, 128>}, {pipeline_mode = #tpu.pipeline_mode<synchronous>, transform_indices = @transform_7, window_bounds = array<i64: 256, 128>}, {pipeline_mode = #tpu.pipeline_mode<synchronous>, transform_indices = @transform_8, window_bounds = array<i64: 1, 128>}, {pipeline_mode = #tpu.pipeline_mode<synchronous>, transform_indices = @transform_9, window_bounds = array<i64: 32, 128>}, {pipeline_mode = #tpu.pipeline_mode<synchronous>, transform_indices = @transform_10, window_bounds = array<i64: 1, 128>}, {transform_indices = @transform_11, window_bounds = array<i64: 1, 8, 128>}, {transform_indices = @transform_12, window_bounds = array<i64: 1, 8, 128>}]} {
    %c0 = arith.constant 0 : index
    %c0_0 = arith.constant 0 : index
    %c0_1 = arith.constant 0 : index
    %0 = vector.load %arg1[%c0, %c0_0, %c0_1] : memref<1x64x16xf32, #tpu.memory_space<vmem>>, vector<1x64x16xf32>
    %1 = vector.shape_cast %0 : vector<1x64x16xf32> to vector<64x16xf32>
    %c0_2 = arith.constant 0 : index
    %c0_3 = arith.constant 0 : index
    %2 = vector.load %arg3[%c0_2, %c0_3] : memref<32x128xf32, #tpu.memory_space<vmem>>, vector<32x128xf32>
    %c0_4 = arith.constant 0 : index
    %c0_5 = arith.constant 0 : index
    %3 = vector.load %arg6[%c0_4, %c0_5] : memref<32x128xf32, #tpu.memory_space<vmem>>, vector<32x128xf32>
    %4 = tpu.iota {dimensions = array<i32: 1>} : vector<8x128xi32>
    %c64_i32 = arith.constant 64 : i32
    %5 = vector.broadcast %c64_i32 : i32 to vector<8x128xi32>
    %6 = arith.cmpi sge, %4, %5 : vector<8x128xi32>
    %c96_i32 = arith.constant 96 : i32
    %7 = vector.broadcast %c96_i32 : i32 to vector<8x128xi32>
    %8 = arith.cmpi slt, %4, %7 : vector<8x128xi32>
    %9 = arith.andi %6, %8 : vector<8x128xi1>
    %c0_6 = arith.constant 0 : index
    %c0_7 = arith.constant 0 : index
    %10 = vector.load %arg2[%c0_6, %c0_7] : memref<16x128xf32, #tpu.memory_space<vmem>>, vector<16x128xf32>
    %cst = arith.constant dense<0.000000e+00> : vector<64x128xf32>
    %11 = tpu.matmul %1, %10, %cst {dimension_numbers = #tpu.dot_dimension_numbers<[1], [0], [0], [1], [0, 0, 1, 1], [], []>} : vector<64x16xf32>, vector<16x128xf32>, vector<64x128xf32> -> vector<64x128xf32>
    %c0_8 = arith.constant 0 : index
    %c0_9 = arith.constant 0 : index
    %12 = vector.load %arg4[%c0_8, %c0_9] : memref<1x128xf32, #tpu.memory_space<vmem>>, vector<1x128xf32>
    %13 = vector.broadcast %12 : vector<1x128xf32> to vector<64x128xf32>
    %14 = arith.addf %11, %13 : vector<64x128xf32>
    %cst_10 = arith.constant 0.000000e+00 : f32
    %15 = vector.broadcast %cst_10 : f32 to vector<8x32xf32>
    %cst_11 = arith.constant 0.000000e+00 : f32
    %16 = vector.broadcast %cst_11 : f32 to vector<8x32xf32>
    %17 = vector.extract_strided_slice %14 {offsets = [0, 0], sizes = [8, 128], strides = [1, 1]} : vector<64x128xf32> to vector<8x128xf32>
    %cst_12 = arith.constant dense<0.000000e+00> : vector<8x128xf32>
    %18 = tpu.matmul %15, %2, %cst_12 {dimension_numbers = #tpu.dot_dimension_numbers<[1], [0], [0], [1], [0, 0, 1, 1], [], []>} : vector<8x32xf32>, vector<32x128xf32>, vector<8x128xf32> -> vector<8x128xf32>
    %19 = arith.addf %17, %18 : vector<8x128xf32>
    %cst_13 = arith.constant 2.000000e+00 : f32
    %20 = vector.broadcast %cst_13 : f32 to vector<8x128xf32>
    %21 = arith.mulf %20, %19 : vector<8x128xf32>
    %22 = arith.select %9, %21, %19 : vector<8x128xi1>, vector<8x128xf32>
    %23 = arith.negf %22 : vector<8x128xf32>
    %24 = math.exp %23 : vector<8x128xf32>
    %cst_14 = arith.constant 1.000000e+00 : f32
    %25 = vector.broadcast %cst_14 : f32 to vector<8x128xf32>
    %26 = arith.addf %25, %24 : vector<8x128xf32>
    %27 = arith.divf %25, %26 : vector<8x128xf32>
    %cst_15 = arith.constant 2.000000e+00 : f32
    %28 = vector.broadcast %cst_15 : f32 to vector<8x128xf32>
    %29 = arith.mulf %28, %27 : vector<8x128xf32>
    %cst_16 = arith.constant 1.000000e+00 : f32
    %30 = vector.broadcast %cst_16 : f32 to vector<8x128xf32>
    %31 = arith.subf %29, %30 : vector<8x128xf32>
    %32 = arith.select %9, %31, %27 : vector<8x128xi1>, vector<8x128xf32>
    %33 = vector.extract_strided_slice %32 {offsets = [0, 0], sizes = [8, 32], strides = [1, 1]} : vector<8x128xf32> to vector<8x32xf32>
    %34 = vector.extract_strided_slice %32 {offsets = [0, 32], sizes = [8, 32], strides = [1, 1]} : vector<8x128xf32> to vector<8x32xf32>
    %35 = vector.extract_strided_slice %32 {offsets = [0, 64], sizes = [8, 32], strides = [1, 1]} : vector<8x128xf32> to vector<8x32xf32>
    %36 = vector.extract_strided_slice %32 {offsets = [0, 96], sizes = [8, 32], strides = [1, 1]} : vector<8x128xf32> to vector<8x32xf32>
    %37 = arith.mulf %34, %16 : vector<8x32xf32>
    %38 = arith.mulf %33, %35 : vector<8x32xf32>
    %39 = arith.addf %37, %38 : vector<8x32xf32>
    %40 = math.tanh %39 : vector<8x32xf32>
    %41 = arith.mulf %36, %40 : vector<8x32xf32>
    %42 = vector.extract_strided_slice %14 {offsets = [8, 0], sizes = [8, 128], strides = [1, 1]} : vector<64x128xf32> to vector<8x128xf32>
    %cst_17 = arith.constant dense<0.000000e+00> : vector<8x128xf32>
    %43 = tpu.matmul %41, %2, %cst_17 {dimension_numbers = #tpu.dot_dimension_numbers<[1], [0], [0], [1], [0, 0, 1, 1], [], []>} : vector<8x32xf32>, vector<32x128xf32>, vector<8x128xf32> -> vector<8x128xf32>
    %44 = arith.addf %42, %43 : vector<8x128xf32>
    %cst_18 = arith.constant 2.000000e+00 : f32
    %45 = vector.broadcast %cst_18 : f32 to vector<8x128xf32>
    %46 = arith.mulf %45, %44 : vector<8x128xf32>
    %47 = arith.select %9, %46, %44 : vector<8x128xi1>, vector<8x128xf32>
    %48 = arith.negf %47 : vector<8x128xf32>
    %49 = math.exp %48 : vector<8x128xf32>
    %cst_19 = arith.constant 1.000000e+00 : f32
    %50 = vector.broadcast %cst_19 : f32 to vector<8x128xf32>
    %51 = arith.addf %50, %49 : vector<8x128xf32>
    %52 = arith.divf %50, %51 : vector<8x128xf32>
    %cst_20 = arith.constant 2.000000e+00 : f32
    %53 = vector.broadcast %cst_20 : f32 to vector<8x128xf32>
    %54 = arith.mulf %53, %52 : vector<8x128xf32>
    %cst_21 = arith.constant 1.000000e+00 : f32
    %55 = vector.broadcast %cst_21 : f32 to vector<8x128xf32>
    %56 = arith.subf %54, %55 : vector<8x128xf32>
    %57 = arith.select %9, %56, %52 : vector<8x128xi1>, vector<8x128xf32>
    %58 = vector.extract_strided_slice %57 {offsets = [0, 0], sizes = [8, 32], strides = [1, 1]} : vector<8x128xf32> to vector<8x32xf32>
    %59 = vector.extract_strided_slice %57 {offsets = [0, 32], sizes = [8, 32], strides = [1, 1]} : vector<8x128xf32> to vector<8x32xf32>
    %60 = vector.extract_strided_slice %57 {offsets = [0, 64], sizes = [8, 32], strides = [1, 1]} : vector<8x128xf32> to vector<8x32xf32>
    %61 = vector.extract_strided_slice %57 {offsets = [0, 96], sizes = [8, 32], strides = [1, 1]} : vector<8x128xf32> to vector<8x32xf32>
    %62 = arith.mulf %59, %39 : vector<8x32xf32>
    %63 = arith.mulf %58, %60 : vector<8x32xf32>
    %64 = arith.addf %62, %63 : vector<8x32xf32>
    %65 = math.tanh %64 : vector<8x32xf32>
    %66 = arith.mulf %61, %65 : vector<8x32xf32>
    %67 = vector.extract_strided_slice %14 {offsets = [16, 0], sizes = [8, 128], strides = [1, 1]} : vector<64x128xf32> to vector<8x128xf32>
    %cst_22 = arith.constant dense<0.000000e+00> : vector<8x128xf32>
    %68 = tpu.matmul %66, %2, %cst_22 {dimension_numbers = #tpu.dot_dimension_numbers<[1], [0], [0], [1], [0, 0, 1, 1], [], []>} : vector<8x32xf32>, vector<32x128xf32>, vector<8x128xf32> -> vector<8x128xf32>
    %69 = arith.addf %67, %68 : vector<8x128xf32>
    %cst_23 = arith.constant 2.000000e+00 : f32
    %70 = vector.broadcast %cst_23 : f32 to vector<8x128xf32>
    %71 = arith.mulf %70, %69 : vector<8x128xf32>
    %72 = arith.select %9, %71, %69 : vector<8x128xi1>, vector<8x128xf32>
    %73 = arith.negf %72 : vector<8x128xf32>
    %74 = math.exp %73 : vector<8x128xf32>
    %cst_24 = arith.constant 1.000000e+00 : f32
    %75 = vector.broadcast %cst_24 : f32 to vector<8x128xf32>
    %76 = arith.addf %75, %74 : vector<8x128xf32>
    %77 = arith.divf %75, %76 : vector<8x128xf32>
    %cst_25 = arith.constant 2.000000e+00 : f32
    %78 = vector.broadcast %cst_25 : f32 to vector<8x128xf32>
    %79 = arith.mulf %78, %77 : vector<8x128xf32>
    %cst_26 = arith.constant 1.000000e+00 : f32
    %80 = vector.broadcast %cst_26 : f32 to vector<8x128xf32>
    %81 = arith.subf %79, %80 : vector<8x128xf32>
    %82 = arith.select %9, %81, %77 : vector<8x128xi1>, vector<8x128xf32>
    %83 = vector.extract_strided_slice %82 {offsets = [0, 0], sizes = [8, 32], strides = [1, 1]} : vector<8x128xf32> to vector<8x32xf32>
    %84 = vector.extract_strided_slice %82 {offsets = [0, 32], sizes = [8, 32], strides = [1, 1]} : vector<8x128xf32> to vector<8x32xf32>
    %85 = vector.extract_strided_slice %82 {offsets = [0, 64], sizes = [8, 32], strides = [1, 1]} : vector<8x128xf32> to vector<8x32xf32>
    %86 = vector.extract_strided_slice %82 {offsets = [0, 96], sizes = [8, 32], strides = [1, 1]} : vector<8x128xf32> to vector<8x32xf32>
    %87 = arith.mulf %84, %64 : vector<8x32xf32>
    %88 = arith.mulf %83, %85 : vector<8x32xf32>
    %89 = arith.addf %87, %88 : vector<8x32xf32>
    %90 = math.tanh %89 : vector<8x32xf32>
    %91 = arith.mulf %86, %90 : vector<8x32xf32>
    %92 = vector.extract_strided_slice %14 {offsets = [24, 0], sizes = [8, 128], strides = [1, 1]} : vector<64x128xf32> to vector<8x128xf32>
    %cst_27 = arith.constant dense<0.000000e+00> : vector<8x128xf32>
    %93 = tpu.matmul %91, %2, %cst_27 {dimension_numbers = #tpu.dot_dimension_numbers<[1], [0], [0], [1], [0, 0, 1, 1], [], []>} : vector<8x32xf32>, vector<32x128xf32>, vector<8x128xf32> -> vector<8x128xf32>
    %94 = arith.addf %92, %93 : vector<8x128xf32>
    %cst_28 = arith.constant 2.000000e+00 : f32
    %95 = vector.broadcast %cst_28 : f32 to vector<8x128xf32>
    %96 = arith.mulf %95, %94 : vector<8x128xf32>
    %97 = arith.select %9, %96, %94 : vector<8x128xi1>, vector<8x128xf32>
    %98 = arith.negf %97 : vector<8x128xf32>
    %99 = math.exp %98 : vector<8x128xf32>
    %cst_29 = arith.constant 1.000000e+00 : f32
    %100 = vector.broadcast %cst_29 : f32 to vector<8x128xf32>
    %101 = arith.addf %100, %99 : vector<8x128xf32>
    %102 = arith.divf %100, %101 : vector<8x128xf32>
    %cst_30 = arith.constant 2.000000e+00 : f32
    %103 = vector.broadcast %cst_30 : f32 to vector<8x128xf32>
    %104 = arith.mulf %103, %102 : vector<8x128xf32>
    %cst_31 = arith.constant 1.000000e+00 : f32
    %105 = vector.broadcast %cst_31 : f32 to vector<8x128xf32>
    %106 = arith.subf %104, %105 : vector<8x128xf32>
    %107 = arith.select %9, %106, %102 : vector<8x128xi1>, vector<8x128xf32>
    %108 = vector.extract_strided_slice %107 {offsets = [0, 0], sizes = [8, 32], strides = [1, 1]} : vector<8x128xf32> to vector<8x32xf32>
    %109 = vector.extract_strided_slice %107 {offsets = [0, 32], sizes = [8, 32], strides = [1, 1]} : vector<8x128xf32> to vector<8x32xf32>
    %110 = vector.extract_strided_slice %107 {offsets = [0, 64], sizes = [8, 32], strides = [1, 1]} : vector<8x128xf32> to vector<8x32xf32>
    %111 = vector.extract_strided_slice %107 {offsets = [0, 96], sizes = [8, 32], strides = [1, 1]} : vector<8x128xf32> to vector<8x32xf32>
    %112 = arith.mulf %109, %89 : vector<8x32xf32>
    %113 = arith.mulf %108, %110 : vector<8x32xf32>
    %114 = arith.addf %112, %113 : vector<8x32xf32>
    %115 = math.tanh %114 : vector<8x32xf32>
    %116 = arith.mulf %111, %115 : vector<8x32xf32>
    %117 = vector.extract_strided_slice %14 {offsets = [32, 0], sizes = [8, 128], strides = [1, 1]} : vector<64x128xf32> to vector<8x128xf32>
    %cst_32 = arith.constant dense<0.000000e+00> : vector<8x128xf32>
    %118 = tpu.matmul %116, %2, %cst_32 {dimension_numbers = #tpu.dot_dimension_numbers<[1], [0], [0], [1], [0, 0, 1, 1], [], []>} : vector<8x32xf32>, vector<32x128xf32>, vector<8x128xf32> -> vector<8x128xf32>
    %119 = arith.addf %117, %118 : vector<8x128xf32>
    %cst_33 = arith.constant 2.000000e+00 : f32
    %120 = vector.broadcast %cst_33 : f32 to vector<8x128xf32>
    %121 = arith.mulf %120, %119 : vector<8x128xf32>
    %122 = arith.select %9, %121, %119 : vector<8x128xi1>, vector<8x128xf32>
    %123 = arith.negf %122 : vector<8x128xf32>
    %124 = math.exp %123 : vector<8x128xf32>
    %cst_34 = arith.constant 1.000000e+00 : f32
    %125 = vector.broadcast %cst_34 : f32 to vector<8x128xf32>
    %126 = arith.addf %125, %124 : vector<8x128xf32>
    %127 = arith.divf %125, %126 : vector<8x128xf32>
    %cst_35 = arith.constant 2.000000e+00 : f32
    %128 = vector.broadcast %cst_35 : f32 to vector<8x128xf32>
    %129 = arith.mulf %128, %127 : vector<8x128xf32>
    %cst_36 = arith.constant 1.000000e+00 : f32
    %130 = vector.broadcast %cst_36 : f32 to vector<8x128xf32>
    %131 = arith.subf %129, %130 : vector<8x128xf32>
    %132 = arith.select %9, %131, %127 : vector<8x128xi1>, vector<8x128xf32>
    %133 = vector.extract_strided_slice %132 {offsets = [0, 0], sizes = [8, 32], strides = [1, 1]} : vector<8x128xf32> to vector<8x32xf32>
    %134 = vector.extract_strided_slice %132 {offsets = [0, 32], sizes = [8, 32], strides = [1, 1]} : vector<8x128xf32> to vector<8x32xf32>
    %135 = vector.extract_strided_slice %132 {offsets = [0, 64], sizes = [8, 32], strides = [1, 1]} : vector<8x128xf32> to vector<8x32xf32>
    %136 = vector.extract_strided_slice %132 {offsets = [0, 96], sizes = [8, 32], strides = [1, 1]} : vector<8x128xf32> to vector<8x32xf32>
    %137 = arith.mulf %134, %114 : vector<8x32xf32>
    %138 = arith.mulf %133, %135 : vector<8x32xf32>
    %139 = arith.addf %137, %138 : vector<8x32xf32>
    %140 = math.tanh %139 : vector<8x32xf32>
    %141 = arith.mulf %136, %140 : vector<8x32xf32>
    %142 = vector.extract_strided_slice %14 {offsets = [40, 0], sizes = [8, 128], strides = [1, 1]} : vector<64x128xf32> to vector<8x128xf32>
    %cst_37 = arith.constant dense<0.000000e+00> : vector<8x128xf32>
    %143 = tpu.matmul %141, %2, %cst_37 {dimension_numbers = #tpu.dot_dimension_numbers<[1], [0], [0], [1], [0, 0, 1, 1], [], []>} : vector<8x32xf32>, vector<32x128xf32>, vector<8x128xf32> -> vector<8x128xf32>
    %144 = arith.addf %142, %143 : vector<8x128xf32>
    %cst_38 = arith.constant 2.000000e+00 : f32
    %145 = vector.broadcast %cst_38 : f32 to vector<8x128xf32>
    %146 = arith.mulf %145, %144 : vector<8x128xf32>
    %147 = arith.select %9, %146, %144 : vector<8x128xi1>, vector<8x128xf32>
    %148 = arith.negf %147 : vector<8x128xf32>
    %149 = math.exp %148 : vector<8x128xf32>
    %cst_39 = arith.constant 1.000000e+00 : f32
    %150 = vector.broadcast %cst_39 : f32 to vector<8x128xf32>
    %151 = arith.addf %150, %149 : vector<8x128xf32>
    %152 = arith.divf %150, %151 : vector<8x128xf32>
    %cst_40 = arith.constant 2.000000e+00 : f32
    %153 = vector.broadcast %cst_40 : f32 to vector<8x128xf32>
    %154 = arith.mulf %153, %152 : vector<8x128xf32>
    %cst_41 = arith.constant 1.000000e+00 : f32
    %155 = vector.broadcast %cst_41 : f32 to vector<8x128xf32>
    %156 = arith.subf %154, %155 : vector<8x128xf32>
    %157 = arith.select %9, %156, %152 : vector<8x128xi1>, vector<8x128xf32>
    %158 = vector.extract_strided_slice %157 {offsets = [0, 0], sizes = [8, 32], strides = [1, 1]} : vector<8x128xf32> to vector<8x32xf32>
    %159 = vector.extract_strided_slice %157 {offsets = [0, 32], sizes = [8, 32], strides = [1, 1]} : vector<8x128xf32> to vector<8x32xf32>
    %160 = vector.extract_strided_slice %157 {offsets = [0, 64], sizes = [8, 32], strides = [1, 1]} : vector<8x128xf32> to vector<8x32xf32>
    %161 = vector.extract_strided_slice %157 {offsets = [0, 96], sizes = [8, 32], strides = [1, 1]} : vector<8x128xf32> to vector<8x32xf32>
    %162 = arith.mulf %159, %139 : vector<8x32xf32>
    %163 = arith.mulf %158, %160 : vector<8x32xf32>
    %164 = arith.addf %162, %163 : vector<8x32xf32>
    %165 = math.tanh %164 : vector<8x32xf32>
    %166 = arith.mulf %161, %165 : vector<8x32xf32>
    %167 = vector.extract_strided_slice %14 {offsets = [48, 0], sizes = [8, 128], strides = [1, 1]} : vector<64x128xf32> to vector<8x128xf32>
    %cst_42 = arith.constant dense<0.000000e+00> : vector<8x128xf32>
    %168 = tpu.matmul %166, %2, %cst_42 {dimension_numbers = #tpu.dot_dimension_numbers<[1], [0], [0], [1], [0, 0, 1, 1], [], []>} : vector<8x32xf32>, vector<32x128xf32>, vector<8x128xf32> -> vector<8x128xf32>
    %169 = arith.addf %167, %168 : vector<8x128xf32>
    %cst_43 = arith.constant 2.000000e+00 : f32
    %170 = vector.broadcast %cst_43 : f32 to vector<8x128xf32>
    %171 = arith.mulf %170, %169 : vector<8x128xf32>
    %172 = arith.select %9, %171, %169 : vector<8x128xi1>, vector<8x128xf32>
    %173 = arith.negf %172 : vector<8x128xf32>
    %174 = math.exp %173 : vector<8x128xf32>
    %cst_44 = arith.constant 1.000000e+00 : f32
    %175 = vector.broadcast %cst_44 : f32 to vector<8x128xf32>
    %176 = arith.addf %175, %174 : vector<8x128xf32>
    %177 = arith.divf %175, %176 : vector<8x128xf32>
    %cst_45 = arith.constant 2.000000e+00 : f32
    %178 = vector.broadcast %cst_45 : f32 to vector<8x128xf32>
    %179 = arith.mulf %178, %177 : vector<8x128xf32>
    %cst_46 = arith.constant 1.000000e+00 : f32
    %180 = vector.broadcast %cst_46 : f32 to vector<8x128xf32>
    %181 = arith.subf %179, %180 : vector<8x128xf32>
    %182 = arith.select %9, %181, %177 : vector<8x128xi1>, vector<8x128xf32>
    %183 = vector.extract_strided_slice %182 {offsets = [0, 0], sizes = [8, 32], strides = [1, 1]} : vector<8x128xf32> to vector<8x32xf32>
    %184 = vector.extract_strided_slice %182 {offsets = [0, 32], sizes = [8, 32], strides = [1, 1]} : vector<8x128xf32> to vector<8x32xf32>
    %185 = vector.extract_strided_slice %182 {offsets = [0, 64], sizes = [8, 32], strides = [1, 1]} : vector<8x128xf32> to vector<8x32xf32>
    %186 = vector.extract_strided_slice %182 {offsets = [0, 96], sizes = [8, 32], strides = [1, 1]} : vector<8x128xf32> to vector<8x32xf32>
    %187 = arith.mulf %184, %164 : vector<8x32xf32>
    %188 = arith.mulf %183, %185 : vector<8x32xf32>
    %189 = arith.addf %187, %188 : vector<8x32xf32>
    %190 = math.tanh %189 : vector<8x32xf32>
    %191 = arith.mulf %186, %190 : vector<8x32xf32>
    %192 = vector.extract_strided_slice %14 {offsets = [56, 0], sizes = [8, 128], strides = [1, 1]} : vector<64x128xf32> to vector<8x128xf32>
    %cst_47 = arith.constant dense<0.000000e+00> : vector<8x128xf32>
    %193 = tpu.matmul %191, %2, %cst_47 {dimension_numbers = #tpu.dot_dimension_numbers<[1], [0], [0], [1], [0, 0, 1, 1], [], []>} : vector<8x32xf32>, vector<32x128xf32>, vector<8x128xf32> -> vector<8x128xf32>
    %194 = arith.addf %192, %193 : vector<8x128xf32>
    %cst_48 = arith.constant 2.000000e+00 : f32
    %195 = vector.broadcast %cst_48 : f32 to vector<8x128xf32>
    %196 = arith.mulf %195, %194 : vector<8x128xf32>
    %197 = arith.select %9, %196, %194 : vector<8x128xi1>, vector<8x128xf32>
    %198 = arith.negf %197 : vector<8x128xf32>
    %199 = math.exp %198 : vector<8x128xf32>
    %cst_49 = arith.constant 1.000000e+00 : f32
    %200 = vector.broadcast %cst_49 : f32 to vector<8x128xf32>
    %201 = arith.addf %200, %199 : vector<8x128xf32>
    %202 = arith.divf %200, %201 : vector<8x128xf32>
    %cst_50 = arith.constant 2.000000e+00 : f32
    %203 = vector.broadcast %cst_50 : f32 to vector<8x128xf32>
    %204 = arith.mulf %203, %202 : vector<8x128xf32>
    %cst_51 = arith.constant 1.000000e+00 : f32
    %205 = vector.broadcast %cst_51 : f32 to vector<8x128xf32>
    %206 = arith.subf %204, %205 : vector<8x128xf32>
    %207 = arith.select %9, %206, %202 : vector<8x128xi1>, vector<8x128xf32>
    %208 = vector.extract_strided_slice %207 {offsets = [0, 0], sizes = [8, 32], strides = [1, 1]} : vector<8x128xf32> to vector<8x32xf32>
    %209 = vector.extract_strided_slice %207 {offsets = [0, 32], sizes = [8, 32], strides = [1, 1]} : vector<8x128xf32> to vector<8x32xf32>
    %210 = vector.extract_strided_slice %207 {offsets = [0, 64], sizes = [8, 32], strides = [1, 1]} : vector<8x128xf32> to vector<8x32xf32>
    %211 = vector.extract_strided_slice %207 {offsets = [0, 96], sizes = [8, 32], strides = [1, 1]} : vector<8x128xf32> to vector<8x32xf32>
    %212 = arith.mulf %209, %189 : vector<8x32xf32>
    %213 = arith.mulf %208, %210 : vector<8x32xf32>
    %214 = arith.addf %212, %213 : vector<8x32xf32>
    %215 = math.tanh %214 : vector<8x32xf32>
    %216 = arith.mulf %211, %215 : vector<8x32xf32>
    %c0_52 = arith.constant 0 : index
    %c0_53 = arith.constant 0 : index
    %217 = vector.load %arg5[%c0_52, %c0_53] : memref<32x128xf32, #tpu.memory_space<vmem>>, vector<32x128xf32>
    %cst_54 = arith.constant dense<0.000000e+00> : vector<8x128xf32>
    %218 = tpu.matmul %216, %217, %cst_54 {dimension_numbers = #tpu.dot_dimension_numbers<[1], [0], [0], [1], [0, 0, 1, 1], [], []>} : vector<8x32xf32>, vector<32x128xf32>, vector<8x128xf32> -> vector<8x128xf32>
    %c0_55 = arith.constant 0 : index
    %c0_56 = arith.constant 0 : index
    %219 = vector.load %arg7[%c0_55, %c0_56] : memref<1x128xf32, #tpu.memory_space<vmem>>, vector<1x128xf32>
    %220 = vector.broadcast %219 : vector<1x128xf32> to vector<8x128xf32>
    %221 = arith.addf %218, %220 : vector<8x128xf32>
    %cst_57 = arith.constant 0.000000e+00 : f32
    %222 = vector.broadcast %cst_57 : f32 to vector<8x32xf32>
    %cst_58 = arith.constant 0.000000e+00 : f32
    %223 = vector.broadcast %cst_58 : f32 to vector<8x32xf32>
    %cst_59 = arith.constant dense<0.000000e+00> : vector<8x128xf32>
    %224 = tpu.matmul %222, %3, %cst_59 {dimension_numbers = #tpu.dot_dimension_numbers<[1], [0], [0], [1], [0, 0, 1, 1], [], []>} : vector<8x32xf32>, vector<32x128xf32>, vector<8x128xf32> -> vector<8x128xf32>
    %225 = arith.addf %221, %224 : vector<8x128xf32>
    %cst_60 = arith.constant 2.000000e+00 : f32
    %226 = vector.broadcast %cst_60 : f32 to vector<8x128xf32>
    %227 = arith.mulf %226, %225 : vector<8x128xf32>
    %228 = arith.select %9, %227, %225 : vector<8x128xi1>, vector<8x128xf32>
    %229 = arith.negf %228 : vector<8x128xf32>
    %230 = math.exp %229 : vector<8x128xf32>
    %cst_61 = arith.constant 1.000000e+00 : f32
    %231 = vector.broadcast %cst_61 : f32 to vector<8x128xf32>
    %232 = arith.addf %231, %230 : vector<8x128xf32>
    %233 = arith.divf %231, %232 : vector<8x128xf32>
    %cst_62 = arith.constant 2.000000e+00 : f32
    %234 = vector.broadcast %cst_62 : f32 to vector<8x128xf32>
    %235 = arith.mulf %234, %233 : vector<8x128xf32>
    %cst_63 = arith.constant 1.000000e+00 : f32
    %236 = vector.broadcast %cst_63 : f32 to vector<8x128xf32>
    %237 = arith.subf %235, %236 : vector<8x128xf32>
    %238 = arith.select %9, %237, %233 : vector<8x128xi1>, vector<8x128xf32>
    %239 = vector.extract_strided_slice %238 {offsets = [0, 0], sizes = [8, 32], strides = [1, 1]} : vector<8x128xf32> to vector<8x32xf32>
    %240 = vector.extract_strided_slice %238 {offsets = [0, 32], sizes = [8, 32], strides = [1, 1]} : vector<8x128xf32> to vector<8x32xf32>
    %241 = vector.extract_strided_slice %238 {offsets = [0, 64], sizes = [8, 32], strides = [1, 1]} : vector<8x128xf32> to vector<8x32xf32>
    %242 = vector.extract_strided_slice %238 {offsets = [0, 96], sizes = [8, 32], strides = [1, 1]} : vector<8x128xf32> to vector<8x32xf32>
    %243 = arith.mulf %240, %223 : vector<8x32xf32>
    %244 = arith.mulf %239, %241 : vector<8x32xf32>
    %245 = arith.addf %243, %244 : vector<8x32xf32>
    %246 = math.tanh %245 : vector<8x32xf32>
    %247 = arith.mulf %242, %246 : vector<8x32xf32>
    %cst_64 = arith.constant dense<0.000000e+00> : vector<8x128xf32>
    %248 = tpu.matmul %247, %3, %cst_64 {dimension_numbers = #tpu.dot_dimension_numbers<[1], [0], [0], [1], [0, 0, 1, 1], [], []>} : vector<8x32xf32>, vector<32x128xf32>, vector<8x128xf32> -> vector<8x128xf32>
    %249 = arith.addf %221, %248 : vector<8x128xf32>
    %cst_65 = arith.constant 2.000000e+00 : f32
    %250 = vector.broadcast %cst_65 : f32 to vector<8x128xf32>
    %251 = arith.mulf %250, %249 : vector<8x128xf32>
    %252 = arith.select %9, %251, %249 : vector<8x128xi1>, vector<8x128xf32>
    %253 = arith.negf %252 : vector<8x128xf32>
    %254 = math.exp %253 : vector<8x128xf32>
    %cst_66 = arith.constant 1.000000e+00 : f32
    %255 = vector.broadcast %cst_66 : f32 to vector<8x128xf32>
    %256 = arith.addf %255, %254 : vector<8x128xf32>
    %257 = arith.divf %255, %256 : vector<8x128xf32>
    %cst_67 = arith.constant 2.000000e+00 : f32
    %258 = vector.broadcast %cst_67 : f32 to vector<8x128xf32>
    %259 = arith.mulf %258, %257 : vector<8x128xf32>
    %cst_68 = arith.constant 1.000000e+00 : f32
    %260 = vector.broadcast %cst_68 : f32 to vector<8x128xf32>
    %261 = arith.subf %259, %260 : vector<8x128xf32>
    %262 = arith.select %9, %261, %257 : vector<8x128xi1>, vector<8x128xf32>
    %263 = vector.extract_strided_slice %262 {offsets = [0, 0], sizes = [8, 32], strides = [1, 1]} : vector<8x128xf32> to vector<8x32xf32>
    %264 = vector.extract_strided_slice %262 {offsets = [0, 32], sizes = [8, 32], strides = [1, 1]} : vector<8x128xf32> to vector<8x32xf32>
    %265 = vector.extract_strided_slice %262 {offsets = [0, 64], sizes = [8, 32], strides = [1, 1]} : vector<8x128xf32> to vector<8x32xf32>
    %266 = vector.extract_strided_slice %262 {offsets = [0, 96], sizes = [8, 32], strides = [1, 1]} : vector<8x128xf32> to vector<8x32xf32>
    %267 = arith.mulf %264, %245 : vector<8x32xf32>
    %268 = arith.mulf %263, %265 : vector<8x32xf32>
    %269 = arith.addf %267, %268 : vector<8x32xf32>
    %270 = math.tanh %269 : vector<8x32xf32>
    %271 = arith.mulf %266, %270 : vector<8x32xf32>
    %cst_69 = arith.constant dense<0.000000e+00> : vector<8x128xf32>
    %272 = tpu.matmul %271, %3, %cst_69 {dimension_numbers = #tpu.dot_dimension_numbers<[1], [0], [0], [1], [0, 0, 1, 1], [], []>} : vector<8x32xf32>, vector<32x128xf32>, vector<8x128xf32> -> vector<8x128xf32>
    %273 = arith.addf %221, %272 : vector<8x128xf32>
    %cst_70 = arith.constant 2.000000e+00 : f32
    %274 = vector.broadcast %cst_70 : f32 to vector<8x128xf32>
    %275 = arith.mulf %274, %273 : vector<8x128xf32>
    %276 = arith.select %9, %275, %273 : vector<8x128xi1>, vector<8x128xf32>
    %277 = arith.negf %276 : vector<8x128xf32>
    %278 = math.exp %277 : vector<8x128xf32>
    %cst_71 = arith.constant 1.000000e+00 : f32
    %279 = vector.broadcast %cst_71 : f32 to vector<8x128xf32>
    %280 = arith.addf %279, %278 : vector<8x128xf32>
    %281 = arith.divf %279, %280 : vector<8x128xf32>
    %cst_72 = arith.constant 2.000000e+00 : f32
    %282 = vector.broadcast %cst_72 : f32 to vector<8x128xf32>
    %283 = arith.mulf %282, %281 : vector<8x128xf32>
    %cst_73 = arith.constant 1.000000e+00 : f32
    %284 = vector.broadcast %cst_73 : f32 to vector<8x128xf32>
    %285 = arith.subf %283, %284 : vector<8x128xf32>
    %286 = arith.select %9, %285, %281 : vector<8x128xi1>, vector<8x128xf32>
    %287 = vector.extract_strided_slice %286 {offsets = [0, 0], sizes = [8, 32], strides = [1, 1]} : vector<8x128xf32> to vector<8x32xf32>
    %288 = vector.extract_strided_slice %286 {offsets = [0, 32], sizes = [8, 32], strides = [1, 1]} : vector<8x128xf32> to vector<8x32xf32>
    %289 = vector.extract_strided_slice %286 {offsets = [0, 64], sizes = [8, 32], strides = [1, 1]} : vector<8x128xf32> to vector<8x32xf32>
    %290 = vector.extract_strided_slice %286 {offsets = [0, 96], sizes = [8, 32], strides = [1, 1]} : vector<8x128xf32> to vector<8x32xf32>
    %291 = arith.mulf %288, %269 : vector<8x32xf32>
    %292 = arith.mulf %287, %289 : vector<8x32xf32>
    %293 = arith.addf %291, %292 : vector<8x32xf32>
    %294 = math.tanh %293 : vector<8x32xf32>
    %295 = arith.mulf %290, %294 : vector<8x32xf32>
    %cst_74 = arith.constant dense<0.000000e+00> : vector<8x128xf32>
    %296 = tpu.matmul %295, %3, %cst_74 {dimension_numbers = #tpu.dot_dimension_numbers<[1], [0], [0], [1], [0, 0, 1, 1], [], []>} : vector<8x32xf32>, vector<32x128xf32>, vector<8x128xf32> -> vector<8x128xf32>
    %297 = arith.addf %221, %296 : vector<8x128xf32>
    %cst_75 = arith.constant 2.000000e+00 : f32
    %298 = vector.broadcast %cst_75 : f32 to vector<8x128xf32>
    %299 = arith.mulf %298, %297 : vector<8x128xf32>
    %300 = arith.select %9, %299, %297 : vector<8x128xi1>, vector<8x128xf32>
    %301 = arith.negf %300 : vector<8x128xf32>
    %302 = math.exp %301 : vector<8x128xf32>
    %cst_76 = arith.constant 1.000000e+00 : f32
    %303 = vector.broadcast %cst_76 : f32 to vector<8x128xf32>
    %304 = arith.addf %303, %302 : vector<8x128xf32>
    %305 = arith.divf %303, %304 : vector<8x128xf32>
    %cst_77 = arith.constant 2.000000e+00 : f32
    %306 = vector.broadcast %cst_77 : f32 to vector<8x128xf32>
    %307 = arith.mulf %306, %305 : vector<8x128xf32>
    %cst_78 = arith.constant 1.000000e+00 : f32
    %308 = vector.broadcast %cst_78 : f32 to vector<8x128xf32>
    %309 = arith.subf %307, %308 : vector<8x128xf32>
    %310 = arith.select %9, %309, %305 : vector<8x128xi1>, vector<8x128xf32>
    %311 = vector.extract_strided_slice %310 {offsets = [0, 0], sizes = [8, 32], strides = [1, 1]} : vector<8x128xf32> to vector<8x32xf32>
    %312 = vector.extract_strided_slice %310 {offsets = [0, 32], sizes = [8, 32], strides = [1, 1]} : vector<8x128xf32> to vector<8x32xf32>
    %313 = vector.extract_strided_slice %310 {offsets = [0, 64], sizes = [8, 32], strides = [1, 1]} : vector<8x128xf32> to vector<8x32xf32>
    %314 = vector.extract_strided_slice %310 {offsets = [0, 96], sizes = [8, 32], strides = [1, 1]} : vector<8x128xf32> to vector<8x32xf32>
    %315 = arith.mulf %312, %293 : vector<8x32xf32>
    %316 = arith.mulf %311, %313 : vector<8x32xf32>
    %317 = arith.addf %315, %316 : vector<8x32xf32>
    %318 = math.tanh %317 : vector<8x32xf32>
    %319 = arith.mulf %314, %318 : vector<8x32xf32>
    %cst_79 = arith.constant dense<0.000000e+00> : vector<8x128xf32>
    %320 = tpu.matmul %319, %3, %cst_79 {dimension_numbers = #tpu.dot_dimension_numbers<[1], [0], [0], [1], [0, 0, 1, 1], [], []>} : vector<8x32xf32>, vector<32x128xf32>, vector<8x128xf32> -> vector<8x128xf32>
    %321 = arith.addf %221, %320 : vector<8x128xf32>
    %cst_80 = arith.constant 2.000000e+00 : f32
    %322 = vector.broadcast %cst_80 : f32 to vector<8x128xf32>
    %323 = arith.mulf %322, %321 : vector<8x128xf32>
    %324 = arith.select %9, %323, %321 : vector<8x128xi1>, vector<8x128xf32>
    %325 = arith.negf %324 : vector<8x128xf32>
    %326 = math.exp %325 : vector<8x128xf32>
    %cst_81 = arith.constant 1.000000e+00 : f32
    %327 = vector.broadcast %cst_81 : f32 to vector<8x128xf32>
    %328 = arith.addf %327, %326 : vector<8x128xf32>
    %329 = arith.divf %327, %328 : vector<8x128xf32>
    %cst_82 = arith.constant 2.000000e+00 : f32
    %330 = vector.broadcast %cst_82 : f32 to vector<8x128xf32>
    %331 = arith.mulf %330, %329 : vector<8x128xf32>
    %cst_83 = arith.constant 1.000000e+00 : f32
    %332 = vector.broadcast %cst_83 : f32 to vector<8x128xf32>
    %333 = arith.subf %331, %332 : vector<8x128xf32>
    %334 = arith.select %9, %333, %329 : vector<8x128xi1>, vector<8x128xf32>
    %335 = vector.extract_strided_slice %334 {offsets = [0, 0], sizes = [8, 32], strides = [1, 1]} : vector<8x128xf32> to vector<8x32xf32>
    %336 = vector.extract_strided_slice %334 {offsets = [0, 32], sizes = [8, 32], strides = [1, 1]} : vector<8x128xf32> to vector<8x32xf32>
    %337 = vector.extract_strided_slice %334 {offsets = [0, 64], sizes = [8, 32], strides = [1, 1]} : vector<8x128xf32> to vector<8x32xf32>
    %338 = vector.extract_strided_slice %334 {offsets = [0, 96], sizes = [8, 32], strides = [1, 1]} : vector<8x128xf32> to vector<8x32xf32>
    %339 = arith.mulf %336, %317 : vector<8x32xf32>
    %340 = arith.mulf %335, %337 : vector<8x32xf32>
    %341 = arith.addf %339, %340 : vector<8x32xf32>
    %342 = math.tanh %341 : vector<8x32xf32>
    %343 = arith.mulf %338, %342 : vector<8x32xf32>
    %cst_84 = arith.constant dense<0.000000e+00> : vector<8x128xf32>
    %344 = tpu.matmul %343, %3, %cst_84 {dimension_numbers = #tpu.dot_dimension_numbers<[1], [0], [0], [1], [0, 0, 1, 1], [], []>} : vector<8x32xf32>, vector<32x128xf32>, vector<8x128xf32> -> vector<8x128xf32>
    %345 = arith.addf %221, %344 : vector<8x128xf32>
    %cst_85 = arith.constant 2.000000e+00 : f32
    %346 = vector.broadcast %cst_85 : f32 to vector<8x128xf32>
    %347 = arith.mulf %346, %345 : vector<8x128xf32>
    %348 = arith.select %9, %347, %345 : vector<8x128xi1>, vector<8x128xf32>
    %349 = arith.negf %348 : vector<8x128xf32>
    %350 = math.exp %349 : vector<8x128xf32>
    %cst_86 = arith.constant 1.000000e+00 : f32
    %351 = vector.broadcast %cst_86 : f32 to vector<8x128xf32>
    %352 = arith.addf %351, %350 : vector<8x128xf32>
    %353 = arith.divf %351, %352 : vector<8x128xf32>
    %cst_87 = arith.constant 2.000000e+00 : f32
    %354 = vector.broadcast %cst_87 : f32 to vector<8x128xf32>
    %355 = arith.mulf %354, %353 : vector<8x128xf32>
    %cst_88 = arith.constant 1.000000e+00 : f32
    %356 = vector.broadcast %cst_88 : f32 to vector<8x128xf32>
    %357 = arith.subf %355, %356 : vector<8x128xf32>
    %358 = arith.select %9, %357, %353 : vector<8x128xi1>, vector<8x128xf32>
    %359 = vector.extract_strided_slice %358 {offsets = [0, 0], sizes = [8, 32], strides = [1, 1]} : vector<8x128xf32> to vector<8x32xf32>
    %360 = vector.extract_strided_slice %358 {offsets = [0, 32], sizes = [8, 32], strides = [1, 1]} : vector<8x128xf32> to vector<8x32xf32>
    %361 = vector.extract_strided_slice %358 {offsets = [0, 64], sizes = [8, 32], strides = [1, 1]} : vector<8x128xf32> to vector<8x32xf32>
    %362 = vector.extract_strided_slice %358 {offsets = [0, 96], sizes = [8, 32], strides = [1, 1]} : vector<8x128xf32> to vector<8x32xf32>
    %363 = arith.mulf %360, %341 : vector<8x32xf32>
    %364 = arith.mulf %359, %361 : vector<8x32xf32>
    %365 = arith.addf %363, %364 : vector<8x32xf32>
    %366 = math.tanh %365 : vector<8x32xf32>
    %367 = arith.mulf %362, %366 : vector<8x32xf32>
    %cst_89 = arith.constant dense<0.000000e+00> : vector<8x128xf32>
    %368 = tpu.matmul %367, %3, %cst_89 {dimension_numbers = #tpu.dot_dimension_numbers<[1], [0], [0], [1], [0, 0, 1, 1], [], []>} : vector<8x32xf32>, vector<32x128xf32>, vector<8x128xf32> -> vector<8x128xf32>
    %369 = arith.addf %221, %368 : vector<8x128xf32>
    %cst_90 = arith.constant 2.000000e+00 : f32
    %370 = vector.broadcast %cst_90 : f32 to vector<8x128xf32>
    %371 = arith.mulf %370, %369 : vector<8x128xf32>
    %372 = arith.select %9, %371, %369 : vector<8x128xi1>, vector<8x128xf32>
    %373 = arith.negf %372 : vector<8x128xf32>
    %374 = math.exp %373 : vector<8x128xf32>
    %cst_91 = arith.constant 1.000000e+00 : f32
    %375 = vector.broadcast %cst_91 : f32 to vector<8x128xf32>
    %376 = arith.addf %375, %374 : vector<8x128xf32>
    %377 = arith.divf %375, %376 : vector<8x128xf32>
    %cst_92 = arith.constant 2.000000e+00 : f32
    %378 = vector.broadcast %cst_92 : f32 to vector<8x128xf32>
    %379 = arith.mulf %378, %377 : vector<8x128xf32>
    %cst_93 = arith.constant 1.000000e+00 : f32
    %380 = vector.broadcast %cst_93 : f32 to vector<8x128xf32>
    %381 = arith.subf %379, %380 : vector<8x128xf32>
    %382 = arith.select %9, %381, %377 : vector<8x128xi1>, vector<8x128xf32>
    %383 = vector.extract_strided_slice %382 {offsets = [0, 0], sizes = [8, 32], strides = [1, 1]} : vector<8x128xf32> to vector<8x32xf32>
    %384 = vector.extract_strided_slice %382 {offsets = [0, 32], sizes = [8, 32], strides = [1, 1]} : vector<8x128xf32> to vector<8x32xf32>
    %385 = vector.extract_strided_slice %382 {offsets = [0, 64], sizes = [8, 32], strides = [1, 1]} : vector<8x128xf32> to vector<8x32xf32>
    %386 = vector.extract_strided_slice %382 {offsets = [0, 96], sizes = [8, 32], strides = [1, 1]} : vector<8x128xf32> to vector<8x32xf32>
    %387 = arith.mulf %384, %365 : vector<8x32xf32>
    %388 = arith.mulf %383, %385 : vector<8x32xf32>
    %389 = arith.addf %387, %388 : vector<8x32xf32>
    %390 = math.tanh %389 : vector<8x32xf32>
    %391 = arith.mulf %386, %390 : vector<8x32xf32>
    %cst_94 = arith.constant dense<0.000000e+00> : vector<8x128xf32>
    %392 = tpu.matmul %391, %3, %cst_94 {dimension_numbers = #tpu.dot_dimension_numbers<[1], [0], [0], [1], [0, 0, 1, 1], [], []>} : vector<8x32xf32>, vector<32x128xf32>, vector<8x128xf32> -> vector<8x128xf32>
    %393 = arith.addf %221, %392 : vector<8x128xf32>
    %cst_95 = arith.constant 2.000000e+00 : f32
    %394 = vector.broadcast %cst_95 : f32 to vector<8x128xf32>
    %395 = arith.mulf %394, %393 : vector<8x128xf32>
    %396 = arith.select %9, %395, %393 : vector<8x128xi1>, vector<8x128xf32>
    %397 = arith.negf %396 : vector<8x128xf32>
    %398 = math.exp %397 : vector<8x128xf32>
    %cst_96 = arith.constant 1.000000e+00 : f32
    %399 = vector.broadcast %cst_96 : f32 to vector<8x128xf32>
    %400 = arith.addf %399, %398 : vector<8x128xf32>
    %401 = arith.divf %399, %400 : vector<8x128xf32>
    %cst_97 = arith.constant 2.000000e+00 : f32
    %402 = vector.broadcast %cst_97 : f32 to vector<8x128xf32>
    %403 = arith.mulf %402, %401 : vector<8x128xf32>
    %cst_98 = arith.constant 1.000000e+00 : f32
    %404 = vector.broadcast %cst_98 : f32 to vector<8x128xf32>
    %405 = arith.subf %403, %404 : vector<8x128xf32>
    %406 = arith.select %9, %405, %401 : vector<8x128xi1>, vector<8x128xf32>
    %407 = vector.extract_strided_slice %406 {offsets = [0, 0], sizes = [8, 32], strides = [1, 1]} : vector<8x128xf32> to vector<8x32xf32>
    %408 = vector.extract_strided_slice %406 {offsets = [0, 32], sizes = [8, 32], strides = [1, 1]} : vector<8x128xf32> to vector<8x32xf32>
    %409 = vector.extract_strided_slice %406 {offsets = [0, 64], sizes = [8, 32], strides = [1, 1]} : vector<8x128xf32> to vector<8x32xf32>
    %410 = vector.extract_strided_slice %406 {offsets = [0, 96], sizes = [8, 32], strides = [1, 1]} : vector<8x128xf32> to vector<8x32xf32>
    %411 = arith.mulf %408, %389 : vector<8x32xf32>
    %412 = arith.mulf %407, %409 : vector<8x32xf32>
    %413 = arith.addf %411, %412 : vector<8x32xf32>
    %414 = math.tanh %413 : vector<8x32xf32>
    %415 = arith.mulf %410, %414 : vector<8x32xf32>
    %416 = tpu.concatenate %247, %271, %295, %319, %343, %367, %391, %415 in 1 : vector<8x32xf32>, vector<8x32xf32>, vector<8x32xf32>, vector<8x32xf32>, vector<8x32xf32>, vector<8x32xf32>, vector<8x32xf32>, vector<8x32xf32> -> vector<8x256xf32>
    %c0_99 = arith.constant 0 : index
    %c0_100 = arith.constant 0 : index
    %417 = vector.load %arg8[%c0_99, %c0_100] : memref<256x128xf32, #tpu.memory_space<vmem>>, vector<256x128xf32>
    %cst_101 = arith.constant dense<0.000000e+00> : vector<8x128xf32>
    %418 = tpu.matmul %416, %417, %cst_101 {dimension_numbers = #tpu.dot_dimension_numbers<[1], [0], [0], [1], [0, 0, 1, 1], [], []>} : vector<8x256xf32>, vector<256x128xf32>, vector<8x128xf32> -> vector<8x128xf32>
    %c0_102 = arith.constant 0 : index
    %c0_103 = arith.constant 0 : index
    %419 = vector.load %arg9[%c0_102, %c0_103] : memref<1x128xf32, #tpu.memory_space<vmem>>, vector<1x128xf32>
    %420 = vector.broadcast %419 : vector<1x128xf32> to vector<8x128xf32>
    %421 = arith.addf %418, %420 : vector<8x128xf32>
    %c0_104 = arith.constant 0 : index
    %c0_105 = arith.constant 0 : index
    %c0_106 = arith.constant 0 : index
    %422 = vector.load %arg12[%c0_104, %c0_105, %c0_106] : memref<1x8x128xf32, #tpu.memory_space<vmem>>, vector<1x8x128xf32>
    %423 = vector.shape_cast %422 : vector<1x8x128xf32> to vector<8x128xf32>
    %424 = vector.shape_cast %421 : vector<8x128xf32> to vector<1x8x128xf32>
    tpu.vector_store %arg12[%c0_104, %c0_105, %c0_106], %424 {strides = array<i32>} : memref<1x8x128xf32, #tpu.memory_space<vmem>>, vector<1x8x128xf32>,
    %c0_107 = arith.constant 0 : index
    %c0_108 = arith.constant 0 : index
    %425 = vector.load %arg10[%c0_107, %c0_108] : memref<32x128xf32, #tpu.memory_space<vmem>>, vector<32x128xf32>
    %cst_109 = arith.constant dense<0.000000e+00> : vector<8x128xf32>
    %426 = tpu.matmul %216, %425, %cst_109 {dimension_numbers = #tpu.dot_dimension_numbers<[1], [0], [0], [1], [0, 0, 1, 1], [], []>} : vector<8x32xf32>, vector<32x128xf32>, vector<8x128xf32> -> vector<8x128xf32>
    %c0_110 = arith.constant 0 : index
    %c0_111 = arith.constant 0 : index
    %427 = vector.load %arg11[%c0_110, %c0_111] : memref<1x128xf32, #tpu.memory_space<vmem>>, vector<1x128xf32>
    %428 = vector.broadcast %427 : vector<1x128xf32> to vector<8x128xf32>
    %429 = arith.addf %426, %428 : vector<8x128xf32>
    %c0_112 = arith.constant 0 : index
    %c0_113 = arith.constant 0 : index
    %c0_114 = arith.constant 0 : index
    %430 = vector.load %arg13[%c0_112, %c0_113, %c0_114] : memref<1x8x128xf32, #tpu.memory_space<vmem>>, vector<1x8x128xf32>
    %431 = vector.shape_cast %430 : vector<1x8x128xf32> to vector<8x128xf32>
    %432 = vector.shape_cast %429 : vector<8x128xf32> to vector<1x8x128xf32>
    tpu.vector_store %arg13[%c0_112, %c0_113, %c0_114], %432 {strides = array<i32>} : memref<1x8x128xf32, #tpu.memory_space<vmem>>, vector<1x8x128xf32>,
    return
  }
  func.func @transform_0(%arg0: i32) -> (i32, i32, i32) {
    %c0_i32 = arith.constant 0 : i32
    %c0_i32_0 = arith.constant 0 : i32
    %c0_i32_1 = arith.constant 0 : i32
    return %arg0, %c0_i32, %c0_i32_0 : i32, i32, i32
  }
  func.func @transform_1(%arg0: i32) -> (i32, i32) {
    %c0_i32 = arith.constant 0 : i32
    %c0_i32_0 = arith.constant 0 : i32
    %c0_i32_1 = arith.constant 0 : i32
    return %c0_i32, %c0_i32_0 : i32, i32
  }
  func.func @transform_2(%arg0: i32) -> (i32, i32) {
    %c0_i32 = arith.constant 0 : i32
    %c0_i32_0 = arith.constant 0 : i32
    %c0_i32_1 = arith.constant 0 : i32
    return %c0_i32, %c0_i32_0 : i32, i32
  }
  func.func @transform_3(%arg0: i32) -> (i32, i32) {
    %c0_i32 = arith.constant 0 : i32
    %c0_i32_0 = arith.constant 0 : i32
    %c0_i32_1 = arith.constant 0 : i32
    return %c0_i32, %c0_i32_0 : i32, i32
  }
  func.func @transform_4(%arg0: i32) -> (i32, i32) {
    %c0_i32 = arith.constant 0 : i32
    %c0_i32_0 = arith.constant 0 : i32
    %c0_i32_1 = arith.constant 0 : i32
    return %c0_i32, %c0_i32_0 : i32, i32
  }
  func.func @transform_5(%arg0: i32) -> (i32, i32) {
    %c0_i32 = arith.constant 0 : i32
    %c0_i32_0 = arith.constant 0 : i32
    %c0_i32_1 = arith.constant 0 : i32
    return %c0_i32, %c0_i32_0 : i32, i32
  }
  func.func @transform_6(%arg0: i32) -> (i32, i32) {
    %c0_i32 = arith.constant 0 : i32
    %c0_i32_0 = arith.constant 0 : i32
    %c0_i32_1 = arith.constant 0 : i32
    return %c0_i32, %c0_i32_0 : i32, i32
  }
  func.func @transform_7(%arg0: i32) -> (i32, i32) {
    %c0_i32 = arith.constant 0 : i32
    %c0_i32_0 = arith.constant 0 : i32
    %c0_i32_1 = arith.constant 0 : i32
    return %c0_i32, %c0_i32_0 : i32, i32
  }
  func.func @transform_8(%arg0: i32) -> (i32, i32) {
    %c0_i32 = arith.constant 0 : i32
    %c0_i32_0 = arith.constant 0 : i32
    %c0_i32_1 = arith.constant 0 : i32
    return %c0_i32, %c0_i32_0 : i32, i32
  }
  func.func @transform_9(%arg0: i32) -> (i32, i32) {
    %c0_i32 = arith.constant 0 : i32
    %c0_i32_0 = arith.constant 0 : i32
    %c0_i32_1 = arith.constant 0 : i32
    return %c0_i32, %c0_i32_0 : i32, i32
  }
  func.func @transform_10(%arg0: i32) -> (i32, i32) {
    %c0_i32 = arith.constant 0 : i32
    %c0_i32_0 = arith.constant 0 : i32
    %c0_i32_1 = arith.constant 0 : i32
    return %c0_i32, %c0_i32_0 : i32, i32
  }
  func.func @transform_11(%arg0: i32) -> (i32, i32, i32) {
    %c0_i32 = arith.constant 0 : i32
    %c0_i32_0 = arith.constant 0 : i32
    %c0_i32_1 = arith.constant 0 : i32
    return %arg0, %c0_i32, %c0_i32_0 : i32, i32, i32
  }
  func.func @transform_12(%arg0: i32) -> (i32, i32, i32) {
    %c0_i32 = arith.constant 0 : i32
    %c0_i32_0 = arith.constant 0 : i32
    %c0_i32_1 = arith.constant 0 : i32
    return %arg0, %c0_i32, %c0_i32_0 : i32, i32, i32
  }
}

</mosaic_0001>

<llo_original>
// kernel: _forward_impl.1
$region0: #{_forward_impl.1}
  #allocation0 [shape = 'u32[]', space=smem, size = 0x4, offset = 0x4, fixed_abs, tag = 'smem constant byte address 0x4 - core index']
  #allocation1 [shape = 'u32[144,128]{1,0:T(1,128)}', space=vmem, size = 0x12000, scoped, tag = 'internal scratch']
  %s0 = inlined_call_operand.vmem [shape: f32[1,64,16], index: 0, kind: input, shape index: {}]
  %s1 = inlined_call_operand.vmem [shape: f32[16,128], index: 1, kind: input, shape index: {}]
  %s2 = inlined_call_operand.vmem [shape: f32[32,128], index: 2, kind: input, shape index: {}]
  %s3 = inlined_call_operand.vmem [shape: f32[1,128], index: 3, kind: input, shape index: {}]
  %s4 = inlined_call_operand.vmem [shape: f32[32,128], index: 4, kind: input, shape index: {}]
  %s5 = inlined_call_operand.vmem [shape: f32[32,128], index: 5, kind: input, shape index: {}]
  %s6 = inlined_call_operand.vmem [shape: f32[1,128], index: 6, kind: input, shape index: {}]
  %s7 = inlined_call_operand.vmem [shape: f32[256,128], index: 7, kind: input, shape index: {}]
  %s8 = inlined_call_operand.vmem [shape: f32[1,128], index: 8, kind: input, shape index: {}]
  %s9 = inlined_call_operand.vmem [shape: f32[32,128], index: 9, kind: input, shape index: {}]
  %s10 = inlined_call_operand.vmem [shape: f32[1,128], index: 10, kind: input, shape index: {}]
  %s11 = inlined_call_operand.vmem [shape: f32[1,8,128], index: 11, kind: output, shape index: {0}]
  %s12 = inlined_call_operand.hbm [shape: f32[1,8,128], index: 12, kind: output, shape index: {1}]
  %13 = xla_tuple %s11, %s12
  %s14 = sld [smem:[#allocation0]]
  $region62: #{_forward_impl.1} parent=0
    _
  %s16 = ssub.s32 1, %s14
  %s17 = scalar_select 0, %s16, %s14
  $region1: #{_forward_impl.1} parent=0
    #allocation2 [shape = 'u8[4096]{0}', space=vmem, size = 0x1000, scoped, tag = 'output window, operand 1, single buffered']
    #allocation3 [shape = 's32[1]{0}', space=sflag, size = 0x4, scoped, tag = 'scoped memory for _forward_impl.1']
    %18 = vsyncpa [#allocation3], 0
    // Predicated region
    $region2: #{_forward_impl.1} parent=1 // pred_check
      _
    $region3: #{_forward_impl.1} parent=1 // pred_check_branch
      %20 = sbr.rel (0) target = $region5
    $region4: #{_forward_impl.1} parent=1 // pred_region
      _
    $region5: #{_forward_impl.1} parent=1 // pred_fallthru
      _
    // Predicated region
    $region6: #{_forward_impl.1} parent=1 // pred_check
      _
    $region7: #{_forward_impl.1} parent=1 // pred_check_branch
      %22 = sbr.rel (0) target = $region9
    $region8: #{_forward_impl.1} parent=1 // pred_region
      _
    $region9: #{_forward_impl.1} parent=1 // pred_fallthru
      _
    // Predicated region
    $region10: #{_forward_impl.1} parent=1 // pred_check
      _
    $region11: #{_forward_impl.1} parent=1 // pred_check_branch
      %24 = sbr.rel (0) target = $region13
    $region12: #{_forward_impl.1} parent=1 // pred_region
      _
    $region13: #{_forward_impl.1} parent=1 // pred_fallthru
      _
    // Predicated region
    $region14: #{_forward_impl.1} parent=1 // pred_check
      _
    $region15: #{_forward_impl.1} parent=1 // pred_check_branch
      %26 = sbr.rel (0) target = $region17
    $region16: #{_forward_impl.1} parent=1 // pred_region
      _
    $region17: #{_forward_impl.1} parent=1 // pred_fallthru
      _
    // Predicated region
    $region18: #{_forward_impl.1} parent=1 // pred_check
      _
    $region19: #{_forward_impl.1} parent=1 // pred_check_branch
      %28 = sbr.rel (0) target = $region21
    $region20: #{_forward_impl.1} parent=1 // pred_region
      _
    $region21: #{_forward_impl.1} parent=1 // pred_fallthru
      _
    // Predicated region
    $region22: #{_forward_impl.1} parent=1 // pred_check
      _
    $region23: #{_forward_impl.1} parent=1 // pred_check_branch
      %30 = sbr.rel (0) target = $region25
    $region24: #{_forward_impl.1} parent=1 // pred_region
      _
    $region25: #{_forward_impl.1} parent=1 // pred_fallthru
      _
    // Predicated region
    $region26: #{_forward_impl.1} parent=1 // pred_check
      _
    $region27: #{_forward_impl.1} parent=1 // pred_check_branch
      %32 = sbr.rel (0) target = $region29
    $region28: #{_forward_impl.1} parent=1 // pred_region
      _
    $region29: #{_forward_impl.1} parent=1 // pred_fallthru
      _
    // Predicated region
    $region30: #{_forward_impl.1} parent=1 // pred_check
      _
    $region31: #{_forward_impl.1} parent=1 // pred_check_branch
      %34 = sbr.rel (0) target = $region33
    $region32: #{_forward_impl.1} parent=1 // pred_region
      _
    $region33: #{_forward_impl.1} parent=1 // pred_fallthru
      _
    // Predicated region
    $region34: #{_forward_impl.1} parent=1 // pred_check
      _
    $region35: #{_forward_impl.1} parent=1 // pred_check_branch
      %36 = sbr.rel (0) target = $region37
    $region36: #{_forward_impl.1} parent=1 // pred_region
      _
    $region37: #{_forward_impl.1} parent=1 // pred_fallthru
      _
    // Predicated region
    $region38: #{_forward_impl.1} parent=1 // pred_check
      _
    $region39: #{_forward_impl.1} parent=1 // pred_check_branch
      %38 = sbr.rel (0) target = $region41
    $region40: #{_forward_impl.1} parent=1 // pred_region
      _
    $region41: #{_forward_impl.1} parent=1 // pred_fallthru
      _
    // Predicated region
    $region42: #{_forward_impl.1} parent=1 // pred_check
      _
    $region43: #{_forward_impl.1} parent=1 // pred_check_branch
      %40 = sbr.rel (0) target = $region45
    $region44: #{_forward_impl.1} parent=1 // pred_region
      _
    $region45: #{_forward_impl.1} parent=1 // pred_fallthru
      _
    %v41 = vld [vmem:[%s0] sm:$0xff]
    %v42 = vld [vmem:[%s0 + $0x8] sm:$0xff]
    %v43 = vld [vmem:[%s0 + $0x10] sm:$0xff]
    %v44 = vld [vmem:[%s0 + $0x18] sm:$0xff]
    %v45 = vld [vmem:[%s0 + $0x20] sm:$0xff]
    %v46 = vld [vmem:[%s0 + $0x28] sm:$0xff]
    %v47 = vld [vmem:[%s0 + $0x30] sm:$0xff]
    %v48 = vld [vmem:[%s0 + $0x38] sm:$0xff]
    %v49 = vld [vmem:[%s2] sm:$0xff]
    %v50 = vld [vmem:[%s2 + $0x8] sm:$0xff]
    %v51 = vld [vmem:[%s2 + $0x10] sm:$0xff]
    %v52 = vld [vmem:[%s2 + $0x18] sm:$0xff]
    %v53 = vld [vmem:[%s5] sm:$0xff]
    %v54 = vld [vmem:[%s5 + $0x8] sm:$0xff]
    %v55 = vld [vmem:[%s5 + $0x10] sm:$0xff]
    %v56 = vld [vmem:[%s5 + $0x18] sm:$0xff]
    %v57 = vlaneseq
    %v58 = vand.u32 %v57, 127
    %vm59 = vcmp.ge.s32.totalorder %v58, 64
    %vm60 = vcmp.lt.s32.totalorder %v58, 96
    %vm61 = vmand %vm59, %vm60
    %v62 = vld [vmem:[%s1] sm:$0xff]
    %v63 = vld [vmem:[%s1 + $0x8] sm:$0xff]
    %v64 = vld [vmem:[%s3] sm:$0x1]
    %v66 = vlaneseq
    %v67 = vshrl.u32 %v66, 7
    %v68 = vsub.s32 0, %v67
    %v69 = vrot.slane %v64, %v68
    %vm71 = vcmask 130048
    %v73 = vsel %vm71, %v41, 0
    %v76 = vsel %vm71, %v42, 0
    %v79 = vsel %vm71, %v43, 0
    %v82 = vsel %vm71, %v44, 0
    %v85 = vsel %vm71, %v45, 0
    %v88 = vsel %vm71, %v46, 0
    %v91 = vsel %vm71, %v47, 0
    %v94 = vsel %vm71, %v48, 0
    %96 = vmatprep.subr.mxu0 0.0
    %97 = vmatpush1.msra.mxu0 %v62
    %98 = vmatprep.subr.mxu0 0.0
    %99 = vmatpush1.msra.mxu0 %v63
    %100 = vmatprep.subr.mxu0 0.0
    %101 = vmatpush1.msra.mxu0 0.0
    %102 = vmatprep.subr.mxu0 0.0
    %103 = vmatpush1.msra.mxu0 0.0
    %104 = vmatprep.subr.mxu0 0.0
    %105 = vmatpush1.msra.mxu0 0.0
    %106 = vmatprep.subr.mxu0 0.0
    %107 = vmatpush1.msra.mxu0 0.0
    %108 = vmatprep.subr.mxu0 0.0
    %109 = vmatpush1.msra.mxu0 0.0
    %110 = vmatprep.subr.mxu0 0.0
    %111 = vmatpush1.msra.mxu0 0.0
    %112 = vmatprep.subr.mxu0 0.0
    %113 = vmatpush1.msra.mxu0 0.0
    %114 = vmatprep.subr.mxu0 0.0
    %115 = vmatpush1.msra.mxu0 0.0
    %116 = vmatprep.subr.mxu0 0.0
    %117 = vmatpush1.msra.mxu0 0.0
    %118 = vmatprep.subr.mxu0 0.0
    %119 = vmatpush1.msra.mxu0 0.0
    %120 = vmatprep.subr.mxu0 0.0
    %121 = vmatpush1.msra.mxu0 0.0
    %122 = vmatprep.subr.mxu0 0.0
    %123 = vmatpush1.msra.mxu0 0.0
    %124 = vmatprep.subr.mxu0 0.0
    %125 = vmatpush1.msra.mxu0 0.0
    %126 = vmatprep.subr.mxu0 0.0
    %127 = vmatpush1.msra.mxu0 0.0
    %128 = vmatprep.subr.mxu0 0.0
    %129 = vmatpush1.msra.mxu0 0.0
    %130 = vmatprep.subr.mxu0 0.0
    %131 = vmatpush1.msra.mxu0 0.0
    %132 = vmatprep.subr.mxu0 0.0
    %133 = vmatpush1.msra.mxu0 0.0
    %134 = vmatprep.subr.mxu0 0.0
    %135 = vmatpush1.msra.mxu0 0.0
    %136 = vmatprep.subr.mxu0 0.0
    %137 = vmatpush1.msra.mxu0 0.0
    %138 = vmatprep.subr.mxu0 0.0
    %139 = vmatpush1.msra.mxu0 0.0
    %140 = vmatprep.subr.mxu0 0.0
    %141 = vmatpush1.msra.mxu0 0.0
    %142 = vmatprep.subr.mxu0 0.0
    %143 = vmatpush1.msra.mxu0 0.0
    %144 = vmatprep.subr.mxu0 0.0
    %145 = vmatpush1.msra.mxu0 0.0
    %146 = vmatprep.subr.mxu0 0.0
    %147 = vmatpush1.msra.mxu0 0.0
    %148 = vmatprep.subr.mxu0 0.0
    %149 = vmatpush1.msra.mxu0 0.0
    %150 = vmatprep.subr.mxu0 0.0
    %151 = vmatpush1.msra.mxu0 0.0
    %152 = vmatprep.subr.mxu0 0.0
    %153 = vmatpush1.msra.mxu0 0.0
    %154 = vmatprep.subr.mxu0 0.0
    %155 = vmatpush1.msra.mxu0 0.0
    %156 = vmatprep.subr.mxu0 0.0
    %157 = vmatpush1.msra.mxu0 0.0
    %158 = vmatprep.subr.mxu0 0.0
    %159 = vmatpush1.msra.mxu0 0.0
    %160 = vmatprep.mubr.f32.mxu0 0.0
    %161 = vmatmul.mubr.f32.gmra.mrb[0].mxu0 %v73
    %v162 = vpop.f32.mrb[0].mxu0
    %v163 = vadd.f32 %v69, %v162
    %v164 = vpop.f32.mrb[0].mxu0
    %165 = vmatprep.mubr.f32.mxu0 0.0
    %166 = vmatmul.mubr.f32.gmra.mrb[0].mxu0 %v76
    %v167 = vpop.f32.mrb[0].mxu0
    %v168 = vadd.f32 %v69, %v167
    %v169 = vpop.f32.mrb[0].mxu0
    %170 = vmatprep.mubr.f32.mxu0 0.0
    %171 = vmatmul.mubr.f32.gmra.mrb[0].mxu0 %v79
    %v172 = vpop.f32.mrb[0].mxu0
    %v173 = vadd.f32 %v69, %v172
    %v174 = vpop.f32.mrb[0].mxu0
    %175 = vmatprep.mubr.f32.mxu0 0.0
    %176 = vmatmul.mubr.f32.gmra.mrb[0].mxu0 %v82
    %v177 = vpop.f32.mrb[0].mxu0
    %v178 = vadd.f32 %v69, %v177
    %v179 = vpop.f32.mrb[0].mxu0
    %180 = vmatprep.mubr.f32.mxu0 0.0
    %181 = vmatmul.mubr.f32.gmra.mrb[0].mxu0 %v85
    %v182 = vpop.f32.mrb[0].mxu0
    %v183 = vadd.f32 %v69, %v182
    %v184 = vpop.f32.mrb[0].mxu0
    %185 = vmatprep.mubr.f32.mxu0 0.0
    %186 = vmatmul.mubr.f32.gmra.mrb[0].mxu0 %v88
    %v187 = vpop.f32.mrb[0].mxu0
    %v188 = vadd.f32 %v69, %v187
    %v189 = vpop.f32.mrb[0].mxu0
    %190 = vmatprep.mubr.f32.mxu0 0.0
    %191 = vmatmul.mubr.f32.gmra.mrb[0].mxu0 %v91
    %v192 = vpop.f32.mrb[0].mxu0
    %v193 = vadd.f32 %v69, %v192
    %v194 = vpop.f32.mrb[0].mxu0
    %195 = vmatprep.mubr.f32.mxu0 0.0
    %196 = vmatmul.mubr.f32.gmra.mrb[0].mxu0 %v94
    %v197 = vpop.f32.mrb[0].mxu0
    %v198 = vadd.f32 %v69, %v197
    %v199 = vpop.f32.mrb[0].mxu0
    %200 = vdwg.mxu0
    %vm201 = vcmask 261120
    %v203 = vsel %vm201, 0.0, 0
    %205 = vmatprep.subr.mxu0 0.0
    %206 = vmatpush1.msra.mxu0 %v49
    %207 = vmatprep.subr.mxu0 0.0
    %208 = vmatpush1.msra.mxu0 %v50
    %209 = vmatprep.subr.mxu0 0.0
    %210 = vmatpush1.msra.mxu0 %v51
    %211 = vmatprep.subr.mxu0 0.0
    %212 = vmatpush1.msra.mxu0 %v52
    %213 = vmatprep.subr.mxu0 0.0
    %214 = vmatpush1.msra.mxu0 0.0
    %215 = vmatprep.subr.mxu0 0.0
    %216 = vmatpush1.msra.mxu0 0.0
    %217 = vmatprep.subr.mxu0 0.0
    %218 = vmatpush1.msra.mxu0 0.0
    %219 = vmatprep.subr.mxu0 0.0
    %220 = vmatpush1.msra.mxu0 0.0
    %221 = vmatprep.subr.mxu0 0.0
    %222 = vmatpush1.msra.mxu0 0.0
    %223 = vmatprep.subr.mxu0 0.0
    %224 = vmatpush1.msra.mxu0 0.0
    %225 = vmatprep.subr.mxu0 0.0
    %226 = vmatpush1.msra.mxu0 0.0
    %227 = vmatprep.subr.mxu0 0.0
    %228 = vmatpush1.msra.mxu0 0.0
    %229 = vmatprep.subr.mxu0 0.0
    %230 = vmatpush1.msra.mxu0 0.0
    %231 = vmatprep.subr.mxu0 0.0
    %232 = vmatpush1.msra.mxu0 0.0
    %233 = vmatprep.subr.mxu0 0.0
    %234 = vmatpush1.msra.mxu0 0.0
    %235 = vmatprep.subr.mxu0 0.0
    %236 = vmatpush1.msra.mxu0 0.0
    %237 = vmatprep.subr.mxu0 0.0
    %238 = vmatpush1.msra.mxu0 0.0
    %239 = vmatprep.subr.mxu0 0.0
    %240 = vmatpush1.msra.mxu0 0.0
    %241 = vmatprep.subr.mxu0 0.0
    %242 = vmatpush1.msra.mxu0 0.0
    %243 = vmatprep.subr.mxu0 0.0
    %244 = vmatpush1.msra.mxu0 0.0
    %245 = vmatprep.subr.mxu0 0.0
    %246 = vmatpush1.msra.mxu0 0.0
    %247 = vmatprep.subr.mxu0 0.0
    %248 = vmatpush1.msra.mxu0 0.0
    %249 = vmatprep.subr.mxu0 0.0
    %250 = vmatpush1.msra.mxu0 0.0
    %251 = vmatprep.subr.mxu0 0.0
    %252 = vmatpush1.msra.mxu0 0.0
    %253 = vmatprep.subr.mxu0 0.0
    %254 = vmatpush1.msra.mxu0 0.0
    %255 = vmatprep.subr.mxu0 0.0
    %256 = vmatpush1.msra.mxu0 0.0
    %257 = vmatprep.subr.mxu0 0.0
    %258 = vmatpush1.msra.mxu0 0.0
    %259 = vmatprep.subr.mxu0 0.0
    %260 = vmatpush1.msra.mxu0 0.0
    %261 = vmatprep.subr.mxu0 0.0
    %262 = vmatpush1.msra.mxu0 0.0
    %263 = vmatprep.subr.mxu0 0.0
    %264 = vmatpush1.msra.mxu0 0.0
    %265 = vmatprep.subr.mxu0 0.0
    %266 = vmatpush1.msra.mxu0 0.0
    %267 = vmatprep.subr.mxu0 0.0
    %268 = vmatpush1.msra.mxu0 0.0
    %269 = vmatprep.mubr.f32.mxu0 0.0
    %270 = vmatmul.mubr.f32.gmra.mrb[0].mxu0 %v203
    %v271 = vpop.f32.mrb[0].mxu0
    %v272 = vadd.f32 0.0, %v271
    %v273 = vpop.f32.mrb[0].mxu0
    %274 = vdwg.mxu0
    %v275 = vadd.f32 %v163, %v272
    %v276 = vmul.f32 %v275, 2.0
    %v277 = vsel %vm61, %v276, %v275
    %v278 = vxor.u32 %v277, 2147483648
    %v279 = vmul.f32 %v278, 1.442695
    %v280 = vpow.pop %v279
    %v281 = vadd.f32 %v280, 1.0
    %v282 = vrcp.pop %v281
    %v283 = vmul.f32 1.0, %v282
    %v284 = vmul.f32 %v283, 2.0
    %v285 = vsub.f32 %v284, 1.0
    %v286 = vsel %vm61, %v285, %v283
    %v287 = vmul.f32 %v286, 0.0
    %289 = vrot.lane.b32.xlu0 %v286, 64
    %v290 = vpop.permute.xlu0 %289
    %v292 = vmul.f32 %v286, %v290
    %294 = vrot.lane.b32.xlu0 %v292, 32
    %v295 = vpop.permute.xlu0 %294
    %v297 = vadd.f32 %v287, %v295
    %v298 = vtanh.pop %v297
    %300 = vrot.lane.b32.xlu0 %v298, 64
    %v301 = vpop.permute.xlu0 %300
    %v303 = vmul.f32 %v286, %v301
    %305 = vrot.lane.b32.xlu0 %v303, 32
    %v306 = vpop.permute.xlu0 %305
    %v307 = vsel %vm201, %v306, 0
    %309 = vmatprep.subr.mxu0 0.0
    %310 = vmatpush1.msra.mxu0 %v49
    %311 = vmatprep.subr.mxu0 0.0
    %312 = vmatpush1.msra.mxu0 %v50
    %313 = vmatprep.subr.mxu0 0.0
    %314 = vmatpush1.msra.mxu0 %v51
    %315 = vmatprep.subr.mxu0 0.0
    %316 = vmatpush1.msra.mxu0 %v52
    %317 = vmatprep.subr.mxu0 0.0
    %318 = vmatpush1.msra.mxu0 0.0
    %319 = vmatprep.subr.mxu0 0.0
    %320 = vmatpush1.msra.mxu0 0.0
    %321 = vmatprep.subr.mxu0 0.0
    %322 = vmatpush1.msra.mxu0 0.0
    %323 = vmatprep.subr.mxu0 0.0
    %324 = vmatpush1.msra.mxu0 0.0
    %325 = vmatprep.subr.mxu0 0.0
    %326 = vmatpush1.msra.mxu0 0.0
    %327 = vmatprep.subr.mxu0 0.0
    %328 = vmatpush1.msra.mxu0 0.0
    %329 = vmatprep.subr.mxu0 0.0
    %330 = vmatpush1.msra.mxu0 0.0
    %331 = vmatprep.subr.mxu0 0.0
    %332 = vmatpush1.msra.mxu0 0.0
    %333 = vmatprep.subr.mxu0 0.0
    %334 = vmatpush1.msra.mxu0 0.0
    %335 = vmatprep.subr.mxu0 0.0
    %336 = vmatpush1.msra.mxu0 0.0
    %337 = vmatprep.subr.mxu0 0.0
    %338 = vmatpush1.msra.mxu0 0.0
    %339 = vmatprep.subr.mxu0 0.0
    %340 = vmatpush1.msra.mxu0 0.0
    %341 = vmatprep.subr.mxu0 0.0
    %342 = vmatpush1.msra.mxu0 0.0
    %343 = vmatprep.subr.mxu0 0.0
    %344 = vmatpush1.msra.mxu0 0.0
    %345 = vmatprep.subr.mxu0 0.0
    %346 = vmatpush1.msra.mxu0 0.0
    %347 = vmatprep.subr.mxu0 0.0
    %348 = vmatpush1.msra.mxu0 0.0
    %349 = vmatprep.subr.mxu0 0.0
    %350 = vmatpush1.msra.mxu0 0.0
    %351 = vmatprep.subr.mxu0 0.0
    %352 = vmatpush1.msra.mxu0 0.0
    %353 = vmatprep.subr.mxu0 0.0
    %354 = vmatpush1.msra.mxu0 0.0
    %355 = vmatprep.subr.mxu0 0.0
    %356 = vmatpush1.msra.mxu0 0.0
    %357 = vmatprep.subr.mxu0 0.0
    %358 = vmatpush1.msra.mxu0 0.0
    %359 = vmatprep.subr.mxu0 0.0
    %360 = vmatpush1.msra.mxu0 0.0
    %361 = vmatprep.subr.mxu0 0.0
    %362 = vmatpush1.msra.mxu0 0.0
    %363 = vmatprep.subr.mxu0 0.0
    %364 = vmatpush1.msra.mxu0 0.0
    %365 = vmatprep.subr.mxu0 0.0
    %366 = vmatpush1.msra.mxu0 0.0
    %367 = vmatprep.subr.mxu0 0.0
    %368 = vmatpush1.msra.mxu0 0.0
    %369 = vmatprep.subr.mxu0 0.0
    %370 = vmatpush1.msra.mxu0 0.0
    %371 = vmatprep.subr.mxu0 0.0
    %372 = vmatpush1.msra.mxu0 0.0
    %373 = vmatprep.mubr.f32.mxu0 0.0
    %374 = vmatmul.mubr.f32.gmra.mrb[0].mxu0 %v307
    %v375 = vpop.f32.mrb[0].mxu0
    %v376 = vadd.f32 0.0, %v375
    %v377 = vpop.f32.mrb[0].mxu0
    %378 = vdwg.mxu0
    %v379 = vadd.f32 %v168, %v376
    %v380 = vmul.f32 %v379, 2.0
    %v381 = vsel %vm61, %v380, %v379
    %v382 = vxor.u32 %v381, 2147483648
    %v383 = vmul.f32 %v382, 1.442695
    %v384 = vpow.pop %v383
    %v385 = vadd.f32 %v384, 1.0
    %v386 = vrcp.pop %v385
    %v387 = vmul.f32 1.0, %v386
    %v388 = vmul.f32 %v387, 2.0
    %v389 = vsub.f32 %v388, 1.0
    %v390 = vsel %vm61, %v389, %v387
    %v391 = vmul.f32 %v390, %v297
    %393 = vrot.lane.b32.xlu0 %v390, 64
    %v394 = vpop.permute.xlu0 %393
    %v396 = vmul.f32 %v390, %v394
    %398 = vrot.lane.b32.xlu0 %v396, 32
    %v399 = vpop.permute.xlu0 %398
    %v401 = vadd.f32 %v391, %v399
    %v402 = vtanh.pop %v401
    %404 = vrot.lane.b32.xlu0 %v402, 64
    %v405 = vpop.permute.xlu0 %404
    %v407 = vmul.f32 %v390, %v405
    %409 = vrot.lane.b32.xlu0 %v407, 32
    %v410 = vpop.permute.xlu0 %409
    %v411 = vsel %vm201, %v410, 0
    %413 = vmatprep.subr.mxu0 0.0
    %414 = vmatpush1.msra.mxu0 %v49
    %415 = vmatprep.subr.mxu0 0.0
    %416 = vmatpush1.msra.mxu0 %v50
    %417 = vmatprep.subr.mxu0 0.0
    %418 = vmatpush1.msra.mxu0 %v51
    %419 = vmatprep.subr.mxu0 0.0
    %420 = vmatpush1.msra.mxu0 %v52
    %421 = vmatprep.subr.mxu0 0.0
    %422 = vmatpush1.msra.mxu0 0.0
    %423 = vmatprep.subr.mxu0 0.0
    %424 = vmatpush1.msra.mxu0 0.0
    %425 = vmatprep.subr.mxu0 0.0
    %426 = vmatpush1.msra.mxu0 0.0
    %427 = vmatprep.subr.mxu0 0.0
    %428 = vmatpush1.msra.mxu0 0.0
    %429 = vmatprep.subr.mxu0 0.0
    %430 = vmatpush1.msra.mxu0 0.0
    %431 = vmatprep.subr.mxu0 0.0
    %432 = vmatpush1.msra.mxu0 0.0
    %433 = vmatprep.subr.mxu0 0.0
    %434 = vmatpush1.msra.mxu0 0.0
    %435 = vmatprep.subr.mxu0 0.0
    %436 = vmatpush1.msra.mxu0 0.0
    %437 = vmatprep.subr.mxu0 0.0
    %438 = vmatpush1.msra.mxu0 0.0
    %439 = vmatprep.subr.mxu0 0.0
    %440 = vmatpush1.msra.mxu0 0.0
    %441 = vmatprep.subr.mxu0 0.0
    %442 = vmatpush1.msra.mxu0 0.0
    %443 = vmatprep.subr.mxu0 0.0
    %444 = vmatpush1.msra.mxu0 0.0
    %445 = vmatprep.subr.mxu0 0.0
    %446 = vmatpush1.msra.mxu0 0.0
    %447 = vmatprep.subr.mxu0 0.0
    %448 = vmatpush1.msra.mxu0 0.0
    %449 = vmatprep.subr.mxu0 0.0
    %450 = vmatpush1.msra.mxu0 0.0
    %451 = vmatprep.subr.mxu0 0.0
    %452 = vmatpush1.msra.mxu0 0.0
    %453 = vmatprep.subr.mxu0 0.0
    %454 = vmatpush1.msra.mxu0 0.0
    %455 = vmatprep.subr.mxu0 0.0
    %456 = vmatpush1.msra.mxu0 0.0
    %457 = vmatprep.subr.mxu0 0.0
    %458 = vmatpush1.msra.mxu0 0.0
    %459 = vmatprep.subr.mxu0 0.0
    %460 = vmatpush1.msra.mxu0 0.0
    %461 = vmatprep.subr.mxu0 0.0
    %462 = vmatpush1.msra.mxu0 0.0
    %463 = vmatprep.subr.mxu0 0.0
    %464 = vmatpush1.msra.mxu0 0.0
    %465 = vmatprep.subr.mxu0 0.0
    %466 = vmatpush1.msra.mxu0 0.0
    %467 = vmatprep.subr.mxu0 0.0
    %468 = vmatpush1.msra.mxu0 0.0
    %469 = vmatprep.subr.mxu0 0.0
    %470 = vmatpush1.msra.mxu0 0.0
    %471 = vmatprep.subr.mxu0 0.0
    %472 = vmatpush1.msra.mxu0 0.0
    %473 = vmatprep.subr.mxu0 0.0
    %474 = vmatpush1.msra.mxu0 0.0
    %475 = vmatprep.subr.mxu0 0.0
    %476 = vmatpush1.msra.mxu0 0.0
    %477 = vmatprep.mubr.f32.mxu0 0.0
    %478 = vmatmul.mubr.f32.gmra.mrb[0].mxu0 %v411
    %v479 = vpop.f32.mrb[0].mxu0
    %v480 = vadd.f32 0.0, %v479
    %v481 = vpop.f32.mrb[0].mxu0
    %482 = vdwg.mxu0
    %v483 = vadd.f32 %v173, %v480
    %v484 = vmul.f32 %v483, 2.0
    %v485 = vsel %vm61, %v484, %v483
    %v486 = vxor.u32 %v485, 2147483648
    %v487 = vmul.f32 %v486, 1.442695
    %v488 = vpow.pop %v487
    %v489 = vadd.f32 %v488, 1.0
    %v490 = vrcp.pop %v489
    %v491 = vmul.f32 1.0, %v490
    %v492 = vmul.f32 %v491, 2.0
    %v493 = vsub.f32 %v492, 1.0
    %v494 = vsel %vm61, %v493, %v491
    %v495 = vmul.f32 %v494, %v401
    %497 = vrot.lane.b32.xlu0 %v494, 64
    %v498 = vpop.permute.xlu0 %497
    %v500 = vmul.f32 %v494, %v498
    %502 = vrot.lane.b32.xlu0 %v500, 32
    %v503 = vpop.permute.xlu0 %502
    %v505 = vadd.f32 %v495, %v503
    %v506 = vtanh.pop %v505
    %508 = vrot.lane.b32.xlu0 %v506, 64
    %v509 = vpop.permute.xlu0 %508
    %v511 = vmul.f32 %v494, %v509
    %513 = vrot.lane.b32.xlu0 %v511, 32
    %v514 = vpop.permute.xlu0 %513
    %v515 = vsel %vm201, %v514, 0
    %517 = vmatprep.subr.mxu0 0.0
    %518 = vmatpush1.msra.mxu0 %v49
    %519 = vmatprep.subr.mxu0 0.0
    %520 = vmatpush1.msra.mxu0 %v50
    %521 = vmatprep.subr.mxu0 0.0
    %522 = vmatpush1.msra.mxu0 %v51
    %523 = vmatprep.subr.mxu0 0.0
    %524 = vmatpush1.msra.mxu0 %v52
    %525 = vmatprep.subr.mxu0 0.0
    %526 = vmatpush1.msra.mxu0 0.0
    %527 = vmatprep.subr.mxu0 0.0
    %528 = vmatpush1.msra.mxu0 0.0
    %529 = vmatprep.subr.mxu0 0.0
    %530 = vmatpush1.msra.mxu0 0.0
    %531 = vmatprep.subr.mxu0 0.0
    %532 = vmatpush1.msra.mxu0 0.0
    %533 = vmatprep.subr.mxu0 0.0
    %534 = vmatpush1.msra.mxu0 0.0
    %535 = vmatprep.subr.mxu0 0.0
    %536 = vmatpush1.msra.mxu0 0.0
    %537 = vmatprep.subr.mxu0 0.0
    %538 = vmatpush1.msra.mxu0 0.0
    %539 = vmatprep.subr.mxu0 0.0
    %540 = vmatpush1.msra.mxu0 0.0
    %541 = vmatprep.subr.mxu0 0.0
    %542 = vmatpush1.msra.mxu0 0.0
    %543 = vmatprep.subr.mxu0 0.0
    %544 = vmatpush1.msra.mxu0 0.0
    %545 = vmatprep.subr.mxu0 0.0
    %546 = vmatpush1.msra.mxu0 0.0
    %547 = vmatprep.subr.mxu0 0.0
    %548 = vmatpush1.msra.mxu0 0.0
    %549 = vmatprep.subr.mxu0 0.0
    %550 = vmatpush1.msra.mxu0 0.0
    %551 = vmatprep.subr.mxu0 0.0
    %552 = vmatpush1.msra.mxu0 0.0
    %553 = vmatprep.subr.mxu0 0.0
    %554 = vmatpush1.msra.mxu0 0.0
    %555 = vmatprep.subr.mxu0 0.0
    %556 = vmatpush1.msra.mxu0 0.0
    %557 = vmatprep.subr.mxu0 0.0
    %558 = vmatpush1.msra.mxu0 0.0
    %559 = vmatprep.subr.mxu0 0.0
    %560 = vmatpush1.msra.mxu0 0.0
    %561 = vmatprep.subr.mxu0 0.0
    %562 = vmatpush1.msra.mxu0 0.0
    %563 = vmatprep.subr.mxu0 0.0
    %564 = vmatpush1.msra.mxu0 0.0
    %565 = vmatprep.subr.mxu0 0.0
    %566 = vmatpush1.msra.mxu0 0.0
    %567 = vmatprep.subr.mxu0 0.0
    %568 = vmatpush1.msra.mxu0 0.0
    %569 = vmatprep.subr.mxu0 0.0
    %570 = vmatpush1.msra.mxu0 0.0
    %571 = vmatprep.subr.mxu0 0.0
    %572 = vmatpush1.msra.mxu0 0.0
    %573 = vmatprep.subr.mxu0 0.0
    %574 = vmatpush1.msra.mxu0 0.0
    %575 = vmatprep.subr.mxu0 0.0
    %576 = vmatpush1.msra.mxu0 0.0
    %577 = vmatprep.subr.mxu0 0.0
    %578 = vmatpush1.msra.mxu0 0.0
    %579 = vmatprep.subr.mxu0 0.0
    %580 = vmatpush1.msra.mxu0 0.0
    %581 = vmatprep.mubr.f32.mxu0 0.0
    %582 = vmatmul.mubr.f32.gmra.mrb[0].mxu0 %v515
    %v583 = vpop.f32.mrb[0].mxu0
    %v584 = vadd.f32 0.0, %v583
    %v585 = vpop.f32.mrb[0].mxu0
    %586 = vdwg.mxu0
    %v587 = vadd.f32 %v178, %v584
    %v588 = vmul.f32 %v587, 2.0
    %v589 = vsel %vm61, %v588, %v587
    %v590 = vxor.u32 %v589, 2147483648
    %v591 = vmul.f32 %v590, 1.442695
    %v592 = vpow.pop %v591
    %v593 = vadd.f32 %v592, 1.0
    %v594 = vrcp.pop %v593
    %v595 = vmul.f32 1.0, %v594
    %v596 = vmul.f32 %v595, 2.0
    %v597 = vsub.f32 %v596, 1.0
    %v598 = vsel %vm61, %v597, %v595
    %v599 = vmul.f32 %v598, %v505
    %601 = vrot.lane.b32.xlu0 %v598, 64
    %v602 = vpop.permute.xlu0 %601
    %v604 = vmul.f32 %v598, %v602
    %606 = vrot.lane.b32.xlu0 %v604, 32
    %v607 = vpop.permute.xlu0 %606
    %v609 = vadd.f32 %v599, %v607
    %v610 = vtanh.pop %v609
    %612 = vrot.lane.b32.xlu0 %v610, 64
    %v613 = vpop.permute.xlu0 %612
    %v615 = vmul.f32 %v598, %v613
    %617 = vrot.lane.b32.xlu0 %v615, 32
    %v618 = vpop.permute.xlu0 %617
    %v619 = vsel %vm201, %v618, 0
    %621 = vmatprep.subr.mxu0 0.0
    %622 = vmatpush1.msra.mxu0 %v49
    %623 = vmatprep.subr.mxu0 0.0
    %624 = vmatpush1.msra.mxu0 %v50
    %625 = vmatprep.subr.mxu0 0.0
    %626 = vmatpush1.msra.mxu0 %v51
    %627 = vmatprep.subr.mxu0 0.0
    %628 = vmatpush1.msra.mxu0 %v52
    %629 = vmatprep.subr.mxu0 0.0
    %630 = vmatpush1.msra.mxu0 0.0
    %631 = vmatprep.subr.mxu0 0.0
    %632 = vmatpush1.msra.mxu0 0.0
    %633 = vmatprep.subr.mxu0 0.0
    %634 = vmatpush1.msra.mxu0 0.0
    %635 = vmatprep.subr.mxu0 0.0
    %636 = vmatpush1.msra.mxu0 0.0
    %637 = vmatprep.subr.mxu0 0.0
    %638 = vmatpush1.msra.mxu0 0.0
    %639 = vmatprep.subr.mxu0 0.0
    %640 = vmatpush1.msra.mxu0 0.0
    %641 = vmatprep.subr.mxu0 0.0
    %642 = vmatpush1.msra.mxu0 0.0
    %643 = vmatprep.subr.mxu0 0.0
    %644 = vmatpush1.msra.mxu0 0.0
    %645 = vmatprep.subr.mxu0 0.0
    %646 = vmatpush1.msra.mxu0 0.0
    %647 = vmatprep.subr.mxu0 0.0
    %648 = vmatpush1.msra.mxu0 0.0
    %649 = vmatprep.subr.mxu0 0.0
    %650 = vmatpush1.msra.mxu0 0.0
    %651 = vmatprep.subr.mxu0 0.0
    %652 = vmatpush1.msra.mxu0 0.0
    %653 = vmatprep.subr.mxu0 0.0
    %654 = vmatpush1.msra.mxu0 0.0
    %655 = vmatprep.subr.mxu0 0.0
    %656 = vmatpush1.msra.mxu0 0.0
    %657 = vmatprep.subr.mxu0 0.0
    %658 = vmatpush1.msra.mxu0 0.0
    %659 = vmatprep.subr.mxu0 0.0
    %660 = vmatpush1.msra.mxu0 0.0
    %661 = vmatprep.subr.mxu0 0.0
    %662 = vmatpush1.msra.mxu0 0.0
    %663 = vmatprep.subr.mxu0 0.0
    %664 = vmatpush1.msra.mxu0 0.0
    %665 = vmatprep.subr.mxu0 0.0
    %666 = vmatpush1.msra.mxu0 0.0
    %667 = vmatprep.subr.mxu0 0.0
    %668 = vmatpush1.msra.mxu0 0.0
    %669 = vmatprep.subr.mxu0 0.0
    %670 = vmatpush1.msra.mxu0 0.0
    %671 = vmatprep.subr.mxu0 0.0
    %672 = vmatpush1.msra.mxu0 0.0
    %673 = vmatprep.subr.mxu0 0.0
    %674 = vmatpush1.msra.mxu0 0.0
    %675 = vmatprep.subr.mxu0 0.0
    %676 = vmatpush1.msra.mxu0 0.0
    %677 = vmatprep.subr.mxu0 0.0
    %678 = vmatpush1.msra.mxu0 0.0
    %679 = vmatprep.subr.mxu0 0.0
    %680 = vmatpush1.msra.mxu0 0.0
    %681 = vmatprep.subr.mxu0 0.0
    %682 = vmatpush1.msra.mxu0 0.0
    %683 = vmatprep.subr.mxu0 0.0
    %684 = vmatpush1.msra.mxu0 0.0
    %685 = vmatprep.mubr.f32.mxu0 0.0
    %686 = vmatmul.mubr.f32.gmra.mrb[0].mxu0 %v619
    %v687 = vpop.f32.mrb[0].mxu0
    %v688 = vadd.f32 0.0, %v687
    %v689 = vpop.f32.mrb[0].mxu0
    %690 = vdwg.mxu0
    %v691 = vadd.f32 %v183, %v688
    %v692 = vmul.f32 %v691, 2.0
    %v693 = vsel %vm61, %v692, %v691
    %v694 = vxor.u32 %v693, 2147483648
    %v695 = vmul.f32 %v694, 1.442695
    %v696 = vpow.pop %v695
    %v697 = vadd.f32 %v696, 1.0
    %v698 = vrcp.pop %v697
    %v699 = vmul.f32 1.0, %v698
    %v700 = vmul.f32 %v699, 2.0
    %v701 = vsub.f32 %v700, 1.0
    %v702 = vsel %vm61, %v701, %v699
    %v703 = vmul.f32 %v702, %v609
    %705 = vrot.lane.b32.xlu0 %v702, 64
    %v706 = vpop.permute.xlu0 %705
    %v708 = vmul.f32 %v702, %v706
    %710 = vrot.lane.b32.xlu0 %v708, 32
    %v711 = vpop.permute.xlu0 %710
    %v713 = vadd.f32 %v703, %v711
    %v714 = vtanh.pop %v713
    %716 = vrot.lane.b32.xlu0 %v714, 64
    %v717 = vpop.permute.xlu0 %716
    %v719 = vmul.f32 %v702, %v717
    %721 = vrot.lane.b32.xlu0 %v719, 32
    %v722 = vpop.permute.xlu0 %721
    %v723 = vsel %vm201, %v722, 0
    %725 = vmatprep.subr.mxu0 0.0
    %726 = vmatpush1.msra.mxu0 %v49
    %727 = vmatprep.subr.mxu0 0.0
    %728 = vmatpush1.msra.mxu0 %v50
    %729 = vmatprep.subr.mxu0 0.0
    %730 = vmatpush1.msra.mxu0 %v51
    %731 = vmatprep.subr.mxu0 0.0
    %732 = vmatpush1.msra.mxu0 %v52
    %733 = vmatprep.subr.mxu0 0.0
    %734 = vmatpush1.msra.mxu0 0.0
    %735 = vmatprep.subr.mxu0 0.0
    %736 = vmatpush1.msra.mxu0 0.0
    %737 = vmatprep.subr.mxu0 0.0
    %738 = vmatpush1.msra.mxu0 0.0
    %739 = vmatprep.subr.mxu0 0.0
    %740 = vmatpush1.msra.mxu0 0.0
    %741 = vmatprep.subr.mxu0 0.0
    %742 = vmatpush1.msra.mxu0 0.0
    %743 = vmatprep.subr.mxu0 0.0
    %744 = vmatpush1.msra.mxu0 0.0
    %745 = vmatprep.subr.mxu0 0.0
    %746 = vmatpush1.msra.mxu0 0.0
    %747 = vmatprep.subr.mxu0 0.0
    %748 = vmatpush1.msra.mxu0 0.0
    %749 = vmatprep.subr.mxu0 0.0
    %750 = vmatpush1.msra.mxu0 0.0
    %751 = vmatprep.subr.mxu0 0.0
    %752 = vmatpush1.msra.mxu0 0.0
    %753 = vmatprep.subr.mxu0 0.0
    %754 = vmatpush1.msra.mxu0 0.0
    %755 = vmatprep.subr.mxu0 0.0
    %756 = vmatpush1.msra.mxu0 0.0
    %757 = vmatprep.subr.mxu0 0.0
    %758 = vmatpush1.msra.mxu0 0.0
    %759 = vmatprep.subr.mxu0 0.0
    %760 = vmatpush1.msra.mxu0 0.0
    %761 = vmatprep.subr.mxu0 0.0
    %762 = vmatpush1.msra.mxu0 0.0
    %763 = vmatprep.subr.mxu0 0.0
    %764 = vmatpush1.msra.mxu0 0.0
    %765 = vmatprep.subr.mxu0 0.0
    %766 = vmatpush1.msra.mxu0 0.0
    %767 = vmatprep.subr.mxu0 0.0
    %768 = vmatpush1.msra.mxu0 0.0
    %769 = vmatprep.subr.mxu0 0.0
    %770 = vmatpush1.msra.mxu0 0.0
    %771 = vmatprep.subr.mxu0 0.0
    %772 = vmatpush1.msra.mxu0 0.0
    %773 = vmatprep.subr.mxu0 0.0
    %774 = vmatpush1.msra.mxu0 0.0
    %775 = vmatprep.subr.mxu0 0.0
    %776 = vmatpush1.msra.mxu0 0.0
    %777 = vmatprep.subr.mxu0 0.0
    %778 = vmatpush1.msra.mxu0 0.0
    %779 = vmatprep.subr.mxu0 0.0
    %780 = vmatpush1.msra.mxu0 0.0
    %781 = vmatprep.subr.mxu0 0.0
    %782 = vmatpush1.msra.mxu0 0.0
    %783 = vmatprep.subr.mxu0 0.0
    %784 = vmatpush1.msra.mxu0 0.0
    %785 = vmatprep.subr.mxu0 0.0
    %786 = vmatpush1.msra.mxu0 0.0
    %787 = vmatprep.subr.mxu0 0.0
    %788 = vmatpush1.msra.mxu0 0.0
    %789 = vmatprep.mubr.f32.mxu0 0.0
    %790 = vmatmul.mubr.f32.gmra.mrb[0].mxu0 %v723
    %v791 = vpop.f32.mrb[0].mxu0
    %v792 = vadd.f32 0.0, %v791
    %v793 = vpop.f32.mrb[0].mxu0
    %794 = vdwg.mxu0
    %v795 = vadd.f32 %v188, %v792
    %v796 = vmul.f32 %v795, 2.0
    %v797 = vsel %vm61, %v796, %v795
    %v798 = vxor.u32 %v797, 2147483648
    %v799 = vmul.f32 %v798, 1.442695
    %v800 = vpow.pop %v799
    %v801 = vadd.f32 %v800, 1.0
    %v802 = vrcp.pop %v801
    %v803 = vmul.f32 1.0, %v802
    %v804 = vmul.f32 %v803, 2.0
    %v805 = vsub.f32 %v804, 1.0
    %v806 = vsel %vm61, %v805, %v803
    %v807 = vmul.f32 %v806, %v713
    %809 = vrot.lane.b32.xlu0 %v806, 64
    %v810 = vpop.permute.xlu0 %809
    %v812 = vmul.f32 %v806, %v810
    %814 = vrot.lane.b32.xlu0 %v812, 32
    %v815 = vpop.permute.xlu0 %814
    %v817 = vadd.f32 %v807, %v815
    %v818 = vtanh.pop %v817
    %820 = vrot.lane.b32.xlu0 %v818, 64
    %v821 = vpop.permute.xlu0 %820
    %v823 = vmul.f32 %v806, %v821
    %825 = vrot.lane.b32.xlu0 %v823, 32
    %v826 = vpop.permute.xlu0 %825
    %v827 = vsel %vm201, %v826, 0
    %829 = vmatprep.subr.mxu0 0.0
    %830 = vmatpush1.msra.mxu0 %v49
    %831 = vmatprep.subr.mxu0 0.0
    %832 = vmatpush1.msra.mxu0 %v50
    %833 = vmatprep.subr.mxu0 0.0
    %834 = vmatpush1.msra.mxu0 %v51
    %835 = vmatprep.subr.mxu0 0.0
    %836 = vmatpush1.msra.mxu0 %v52
    %837 = vmatprep.subr.mxu0 0.0
    %838 = vmatpush1.msra.mxu0 0.0
    %839 = vmatprep.subr.mxu0 0.0
    %840 = vmatpush1.msra.mxu0 0.0
    %841 = vmatprep.subr.mxu0 0.0
    %842 = vmatpush1.msra.mxu0 0.0
    %843 = vmatprep.subr.mxu0 0.0
    %844 = vmatpush1.msra.mxu0 0.0
    %845 = vmatprep.subr.mxu0 0.0
    %846 = vmatpush1.msra.mxu0 0.0
    %847 = vmatprep.subr.mxu0 0.0
    %848 = vmatpush1.msra.mxu0 0.0
    %849 = vmatprep.subr.mxu0 0.0
    %850 = vmatpush1.msra.mxu0 0.0
    %851 = vmatprep.subr.mxu0 0.0
    %852 = vmatpush1.msra.mxu0 0.0
    %853 = vmatprep.subr.mxu0 0.0
    %854 = vmatpush1.msra.mxu0 0.0
    %855 = vmatprep.subr.mxu0 0.0
    %856 = vmatpush1.msra.mxu0 0.0
    %857 = vmatprep.subr.mxu0 0.0
    %858 = vmatpush1.msra.mxu0 0.0
    %859 = vmatprep.subr.mxu0 0.0
    %860 = vmatpush1.msra.mxu0 0.0
    %861 = vmatprep.subr.mxu0 0.0
    %862 = vmatpush1.msra.mxu0 0.0
    %863 = vmatprep.subr.mxu0 0.0
    %864 = vmatpush1.msra.mxu0 0.0
    %865 = vmatprep.subr.mxu0 0.0
    %866 = vmatpush1.msra.mxu0 0.0
    %867 = vmatprep.subr.mxu0 0.0
    %868 = vmatpush1.msra.mxu0 0.0
    %869 = vmatprep.subr.mxu0 0.0
    %870 = vmatpush1.msra.mxu0 0.0
    %871 = vmatprep.subr.mxu0 0.0
    %872 = vmatpush1.msra.mxu0 0.0
    %873 = vmatprep.subr.mxu0 0.0
    %874 = vmatpush1.msra.mxu0 0.0
    %875 = vmatprep.subr.mxu0 0.0
    %876 = vmatpush1.msra.mxu0 0.0
    %877 = vmatprep.subr.mxu0 0.0
    %878 = vmatpush1.msra.mxu0 0.0
    %879 = vmatprep.subr.mxu0 0.0
    %880 = vmatpush1.msra.mxu0 0.0
    %881 = vmatprep.subr.mxu0 0.0
    %882 = vmatpush1.msra.mxu0 0.0
    %883 = vmatprep.subr.mxu0 0.0
    %884 = vmatpush1.msra.mxu0 0.0
    %885 = vmatprep.subr.mxu0 0.0
    %886 = vmatpush1.msra.mxu0 0.0
    %887 = vmatprep.subr.mxu0 0.0
    %888 = vmatpush1.msra.mxu0 0.0
    %889 = vmatprep.subr.mxu0 0.0
    %890 = vmatpush1.msra.mxu0 0.0
    %891 = vmatprep.subr.mxu0 0.0
    %892 = vmatpush1.msra.mxu0 0.0
    %893 = vmatprep.mubr.f32.mxu0 0.0
    %894 = vmatmul.mubr.f32.gmra.mrb[0].mxu0 %v827
    %v895 = vpop.f32.mrb[0].mxu0
    %v896 = vadd.f32 0.0, %v895
    %v897 = vpop.f32.mrb[0].mxu0
    %898 = vdwg.mxu0
    %v899 = vadd.f32 %v193, %v896
    %v900 = vmul.f32 %v899, 2.0
    %v901 = vsel %vm61, %v900, %v899
    %v902 = vxor.u32 %v901, 2147483648
    %v903 = vmul.f32 %v902, 1.442695
    %v904 = vpow.pop %v903
    %v905 = vadd.f32 %v904, 1.0
    %v906 = vrcp.pop %v905
    %v907 = vmul.f32 1.0, %v906
    %v908 = vmul.f32 %v907, 2.0
    %v909 = vsub.f32 %v908, 1.0
    %v910 = vsel %vm61, %v909, %v907
    %v911 = vmul.f32 %v910, %v817
    %913 = vrot.lane.b32.xlu0 %v910, 64
    %v914 = vpop.permute.xlu0 %913
    %v916 = vmul.f32 %v910, %v914
    %918 = vrot.lane.b32.xlu0 %v916, 32
    %v919 = vpop.permute.xlu0 %918
    %v921 = vadd.f32 %v911, %v919
    %v922 = vtanh.pop %v921
    %924 = vrot.lane.b32.xlu0 %v922, 64
    %v925 = vpop.permute.xlu0 %924
    %v927 = vmul.f32 %v910, %v925
    %929 = vrot.lane.b32.xlu0 %v927, 32
    %v930 = vpop.permute.xlu0 %929
    %v931 = vsel %vm201, %v930, 0
    %933 = vmatprep.subr.mxu0 0.0
    %934 = vmatpush1.msra.mxu0 %v49
    %935 = vmatprep.subr.mxu0 0.0
    %936 = vmatpush1.msra.mxu0 %v50
    %937 = vmatprep.subr.mxu0 0.0
    %938 = vmatpush1.msra.mxu0 %v51
    %939 = vmatprep.subr.mxu0 0.0
    %940 = vmatpush1.msra.mxu0 %v52
    %941 = vmatprep.subr.mxu0 0.0
    %942 = vmatpush1.msra.mxu0 0.0
    %943 = vmatprep.subr.mxu0 0.0
    %944 = vmatpush1.msra.mxu0 0.0
    %945 = vmatprep.subr.mxu0 0.0
    %946 = vmatpush1.msra.mxu0 0.0
    %947 = vmatprep.subr.mxu0 0.0
    %948 = vmatpush1.msra.mxu0 0.0
    %949 = vmatprep.subr.mxu0 0.0
    %950 = vmatpush1.msra.mxu0 0.0
    %951 = vmatprep.subr.mxu0 0.0
    %952 = vmatpush1.msra.mxu0 0.0
    %953 = vmatprep.subr.mxu0 0.0
    %954 = vmatpush1.msra.mxu0 0.0
    %955 = vmatprep.subr.mxu0 0.0
    %956 = vmatpush1.msra.mxu0 0.0
    %957 = vmatprep.subr.mxu0 0.0
    %958 = vmatpush1.msra.mxu0 0.0
    %959 = vmatprep.subr.mxu0 0.0
    %960 = vmatpush1.msra.mxu0 0.0
    %961 = vmatprep.subr.mxu0 0.0
    %962 = vmatpush1.msra.mxu0 0.0
    %963 = vmatprep.subr.mxu0 0.0
    %964 = vmatpush1.msra.mxu0 0.0
    %965 = vmatprep.subr.mxu0 0.0
    %966 = vmatpush1.msra.mxu0 0.0
    %967 = vmatprep.subr.mxu0 0.0
    %968 = vmatpush1.msra.mxu0 0.0
    %969 = vmatprep.subr.mxu0 0.0
    %970 = vmatpush1.msra.mxu0 0.0
    %971 = vmatprep.subr.mxu0 0.0
    %972 = vmatpush1.msra.mxu0 0.0
    %973 = vmatprep.subr.mxu0 0.0
    %974 = vmatpush1.msra.mxu0 0.0
    %975 = vmatprep.subr.mxu0 0.0
    %976 = vmatpush1.msra.mxu0 0.0
    %977 = vmatprep.subr.mxu0 0.0
    %978 = vmatpush1.msra.mxu0 0.0
    %979 = vmatprep.subr.mxu0 0.0
    %980 = vmatpush1.msra.mxu0 0.0
    %981 = vmatprep.subr.mxu0 0.0
    %982 = vmatpush1.msra.mxu0 0.0
    %983 = vmatprep.subr.mxu0 0.0
    %984 = vmatpush1.msra.mxu0 0.0
    %985 = vmatprep.subr.mxu0 0.0
    %986 = vmatpush1.msra.mxu0 0.0
    %987 = vmatprep.subr.mxu0 0.0
    %988 = vmatpush1.msra.mxu0 0.0
    %989 = vmatprep.subr.mxu0 0.0
    %990 = vmatpush1.msra.mxu0 0.0
    %991 = vmatprep.subr.mxu0 0.0
    %992 = vmatpush1.msra.mxu0 0.0
    %993 = vmatprep.subr.mxu0 0.0
    %994 = vmatpush1.msra.mxu0 0.0
    %995 = vmatprep.subr.mxu0 0.0
    %996 = vmatpush1.msra.mxu0 0.0
    %997 = vmatprep.mubr.f32.mxu0 0.0
    %998 = vmatmul.mubr.f32.gmra.mrb[0].mxu0 %v931
    %v999 = vpop.f32.mrb[0].mxu0
    %v1000 = vadd.f32 0.0, %v999
    %v1001 = vpop.f32.mrb[0].mxu0
    %1002 = vdwg.mxu0
    %v1003 = vadd.f32 %v198, %v1000
    %v1004 = vmul.f32 %v1003, 2.0
    %v1005 = vsel %vm61, %v1004, %v1003
    %v1006 = vxor.u32 %v1005, 2147483648
    %v1007 = vmul.f32 %v1006, 1.442695
    %v1008 = vpow.pop %v1007
    %v1009 = vadd.f32 %v1008, 1.0
    %v1010 = vrcp.pop %v1009
    %v1011 = vmul.f32 1.0, %v1010
    %v1012 = vmul.f32 %v1011, 2.0
    %v1013 = vsub.f32 %v1012, 1.0
    %v1014 = vsel %vm61, %v1013, %v1011
    %v1015 = vmul.f32 %v1014, %v921
    %1017 = vrot.lane.b32.xlu0 %v1014, 64
    %v1018 = vpop.permute.xlu0 %1017
    %v1020 = vmul.f32 %v1014, %v1018
    %1022 = vrot.lane.b32.xlu0 %v1020, 32
    %v1023 = vpop.permute.xlu0 %1022
    %v1025 = vadd.f32 %v1015, %v1023
    %v1026 = vtanh.pop %v1025
    %1028 = vrot.lane.b32.xlu0 %v1026, 64
    %v1029 = vpop.permute.xlu0 %1028
    %v1031 = vmul.f32 %v1014, %v1029
    %v1032 = vld [vmem:[%s4] sm:$0xff]
    %v1033 = vld [vmem:[%s4 + $0x8] sm:$0xff]
    %v1034 = vld [vmem:[%s4 + $0x10] sm:$0xff]
    %v1035 = vld [vmem:[%s4 + $0x18] sm:$0xff]
    %v1036 = vld [vmem:[%s6] sm:$0x1]
    %v1038 = vlaneseq
    %v1039 = vshrl.u32 %v1038, 7
    %v1040 = vsub.s32 0, %v1039
    %v1041 = vrot.slane %v1036, %v1040
    %1044 = vrot.lane.b32.xlu0 %v1031, 32
    %v1045 = vpop.permute.xlu0 %1044
    %v1046 = vsel %vm201, %v1045, 0
    %1048 = vmatprep.subr.mxu0 0.0
    %1049 = vmatpush1.msra.mxu0 %v1032
    %1050 = vmatprep.subr.mxu0 0.0
    %1051 = vmatpush1.msra.mxu0 %v1033
    %1052 = vmatprep.subr.mxu0 0.0
    %1053 = vmatpush1.msra.mxu0 %v1034
    %1054 = vmatprep.subr.mxu0 0.0
    %1055 = vmatpush1.msra.mxu0 %v1035
    %1056 = vmatprep.subr.mxu0 0.0
    %1057 = vmatpush1.msra.mxu0 0.0
    %1058 = vmatprep.subr.mxu0 0.0
    %1059 = vmatpush1.msra.mxu0 0.0
    %1060 = vmatprep.subr.mxu0 0.0
    %1061 = vmatpush1.msra.mxu0 0.0
    %1062 = vmatprep.subr.mxu0 0.0
    %1063 = vmatpush1.msra.mxu0 0.0
    %1064 = vmatprep.subr.mxu0 0.0
    %1065 = vmatpush1.msra.mxu0 0.0
    %1066 = vmatprep.subr.mxu0 0.0
    %1067 = vmatpush1.msra.mxu0 0.0
    %1068 = vmatprep.subr.mxu0 0.0
    %1069 = vmatpush1.msra.mxu0 0.0
    %1070 = vmatprep.subr.mxu0 0.0
    %1071 = vmatpush1.msra.mxu0 0.0
    %1072 = vmatprep.subr.mxu0 0.0
    %1073 = vmatpush1.msra.mxu0 0.0
    %1074 = vmatprep.subr.mxu0 0.0
    %1075 = vmatpush1.msra.mxu0 0.0
    %1076 = vmatprep.subr.mxu0 0.0
    %1077 = vmatpush1.msra.mxu0 0.0
    %1078 = vmatprep.subr.mxu0 0.0
    %1079 = vmatpush1.msra.mxu0 0.0
    %1080 = vmatprep.subr.mxu0 0.0
    %1081 = vmatpush1.msra.mxu0 0.0
    %1082 = vmatprep.subr.mxu0 0.0
    %1083 = vmatpush1.msra.mxu0 0.0
    %1084 = vmatprep.subr.mxu0 0.0
    %1085 = vmatpush1.msra.mxu0 0.0
    %1086 = vmatprep.subr.mxu0 0.0
    %1087 = vmatpush1.msra.mxu0 0.0
    %1088 = vmatprep.subr.mxu0 0.0
    %1089 = vmatpush1.msra.mxu0 0.0
    %1090 = vmatprep.subr.mxu0 0.0
    %1091 = vmatpush1.msra.mxu0 0.0
    %1092 = vmatprep.subr.mxu0 0.0
    %1093 = vmatpush1.msra.mxu0 0.0
    %1094 = vmatprep.subr.mxu0 0.0
    %1095 = vmatpush1.msra.mxu0 0.0
    %1096 = vmatprep.subr.mxu0 0.0
    %1097 = vmatpush1.msra.mxu0 0.0
    %1098 = vmatprep.subr.mxu0 0.0
    %1099 = vmatpush1.msra.mxu0 0.0
    %1100 = vmatprep.subr.mxu0 0.0
    %1101 = vmatpush1.msra.mxu0 0.0
    %1102 = vmatprep.subr.mxu0 0.0
    %1103 = vmatpush1.msra.mxu0 0.0
    %1104 = vmatprep.subr.mxu0 0.0
    %1105 = vmatpush1.msra.mxu0 0.0
    %1106 = vmatprep.subr.mxu0 0.0
    %1107 = vmatpush1.msra.mxu0 0.0
    %1108 = vmatprep.subr.mxu0 0.0
    %1109 = vmatpush1.msra.mxu0 0.0
    %1110 = vmatprep.subr.mxu0 0.0
    %1111 = vmatpush1.msra.mxu0 0.0
    %1112 = vmatprep.mubr.f32.mxu0 0.0
    %1113 = vmatmul.mubr.f32.gmra.mrb[0].mxu0 %v1046
    %v1114 = vpop.f32.mrb[0].mxu0
    %v1115 = vadd.f32 %v1041, %v1114
    %v1116 = vpop.f32.mrb[0].mxu0
    %1117 = vdwg.mxu0
    %1118 = vmatprep.subr.mxu0 0.0
    %1119 = vmatpush1.msra.mxu0 %v53
    %1120 = vmatprep.subr.mxu0 0.0
    %1121 = vmatpush1.msra.mxu0 %v54
    %1122 = vmatprep.subr.mxu0 0.0
    %1123 = vmatpush1.msra.mxu0 %v55
    %1124 = vmatprep.subr.mxu0 0.0
    %1125 = vmatpush1.msra.mxu0 %v56
    %1126 = vmatprep.subr.mxu0 0.0
    %1127 = vmatpush1.msra.mxu0 0.0
    %1128 = vmatprep.subr.mxu0 0.0
    %1129 = vmatpush1.msra.mxu0 0.0
    %1130 = vmatprep.subr.mxu0 0.0
    %1131 = vmatpush1.msra.mxu0 0.0
    %1132 = vmatprep.subr.mxu0 0.0
    %1133 = vmatpush1.msra.mxu0 0.0
    %1134 = vmatprep.subr.mxu0 0.0
    %1135 = vmatpush1.msra.mxu0 0.0
    %1136 = vmatprep.subr.mxu0 0.0
    %1137 = vmatpush1.msra.mxu0 0.0
    %1138 = vmatprep.subr.mxu0 0.0
    %1139 = vmatpush1.msra.mxu0 0.0
    %1140 = vmatprep.subr.mxu0 0.0
    %1141 = vmatpush1.msra.mxu0 0.0
    %1142 = vmatprep.subr.mxu0 0.0
    %1143 = vmatpush1.msra.mxu0 0.0
    %1144 = vmatprep.subr.mxu0 0.0
    %1145 = vmatpush1.msra.mxu0 0.0
    %1146 = vmatprep.subr.mxu0 0.0
    %1147 = vmatpush1.msra.mxu0 0.0
    %1148 = vmatprep.subr.mxu0 0.0
    %1149 = vmatpush1.msra.mxu0 0.0
    %1150 = vmatprep.subr.mxu0 0.0
    %1151 = vmatpush1.msra.mxu0 0.0
    %1152 = vmatprep.subr.mxu0 0.0
    %1153 = vmatpush1.msra.mxu0 0.0
    %1154 = vmatprep.subr.mxu0 0.0
    %1155 = vmatpush1.msra.mxu0 0.0
    %1156 = vmatprep.subr.mxu0 0.0
    %1157 = vmatpush1.msra.mxu0 0.0
    %1158 = vmatprep.subr.mxu0 0.0
    %1159 = vmatpush1.msra.mxu0 0.0
    %1160 = vmatprep.subr.mxu0 0.0
    %1161 = vmatpush1.msra.mxu0 0.0
    %1162 = vmatprep.subr.mxu0 0.0
    %1163 = vmatpush1.msra.mxu0 0.0
    %1164 = vmatprep.subr.mxu0 0.0
    %1165 = vmatpush1.msra.mxu0 0.0
    %1166 = vmatprep.subr.mxu0 0.0
    %1167 = vmatpush1.msra.mxu0 0.0
    %1168 = vmatprep.subr.mxu0 0.0
    %1169 = vmatpush1.msra.mxu0 0.0
    %1170 = vmatprep.subr.mxu0 0.0
    %1171 = vmatpush1.msra.mxu0 0.0
    %1172 = vmatprep.subr.mxu0 0.0
    %1173 = vmatpush1.msra.mxu0 0.0
    %1174 = vmatprep.subr.mxu0 0.0
    %1175 = vmatpush1.msra.mxu0 0.0
    %1176 = vmatprep.subr.mxu0 0.0
    %1177 = vmatpush1.msra.mxu0 0.0
    %1178 = vmatprep.subr.mxu0 0.0
    %1179 = vmatpush1.msra.mxu0 0.0
    %1180 = vmatprep.subr.mxu0 0.0
    %1181 = vmatpush1.msra.mxu0 0.0
    %1182 = vmatprep.mubr.f32.mxu0 0.0
    %1183 = vmatmul.mubr.f32.gmra.mrb[0].mxu0 %v203
    %v1184 = vpop.f32.mrb[0].mxu0
    %v1185 = vadd.f32 0.0, %v1184
    %v1186 = vpop.f32.mrb[0].mxu0
    %1187 = vdwg.mxu0
    %v1188 = vadd.f32 %v1115, %v1185
    %v1189 = vmul.f32 %v1188, 2.0
    %v1190 = vsel %vm61, %v1189, %v1188
    %v1191 = vxor.u32 %v1190, 2147483648
    %v1192 = vmul.f32 %v1191, 1.442695
    %v1193 = vpow.pop %v1192
    %v1194 = vadd.f32 %v1193, 1.0
    %v1195 = vrcp.pop %v1194
    %v1196 = vmul.f32 1.0, %v1195
    %v1197 = vmul.f32 %v1196, 2.0
    %v1198 = vsub.f32 %v1197, 1.0
    %v1199 = vsel %vm61, %v1198, %v1196
    %v1200 = vmul.f32 %v1199, 0.0
    %1202 = vrot.lane.b32.xlu0 %v1199, 64
    %v1203 = vpop.permute.xlu0 %1202
    %v1205 = vmul.f32 %v1199, %v1203
    %1207 = vrot.lane.b32.xlu0 %v1205, 32
    %v1208 = vpop.permute.xlu0 %1207
    %v1210 = vadd.f32 %v1200, %v1208
    %v1211 = vtanh.pop %v1210
    %1213 = vrot.lane.b32.xlu0 %v1211, 64
    %v1214 = vpop.permute.xlu0 %1213
    %v1216 = vmul.f32 %v1199, %v1214
    %1218 = vrot.lane.b32.xlu0 %v1216, 32
    %v1219 = vpop.permute.xlu0 %1218
    %v1220 = vsel %vm201, %v1219, 0
    %1222 = vmatprep.subr.mxu0 0.0
    %1223 = vmatpush1.msra.mxu0 %v53
    %1224 = vmatprep.subr.mxu0 0.0
    %1225 = vmatpush1.msra.mxu0 %v54
    %1226 = vmatprep.subr.mxu0 0.0
    %1227 = vmatpush1.msra.mxu0 %v55
    %1228 = vmatprep.subr.mxu0 0.0
    %1229 = vmatpush1.msra.mxu0 %v56
    %1230 = vmatprep.subr.mxu0 0.0
    %1231 = vmatpush1.msra.mxu0 0.0
    %1232 = vmatprep.subr.mxu0 0.0
    %1233 = vmatpush1.msra.mxu0 0.0
    %1234 = vmatprep.subr.mxu0 0.0
    %1235 = vmatpush1.msra.mxu0 0.0
    %1236 = vmatprep.subr.mxu0 0.0
    %1237 = vmatpush1.msra.mxu0 0.0
    %1238 = vmatprep.subr.mxu0 0.0
    %1239 = vmatpush1.msra.mxu0 0.0
    %1240 = vmatprep.subr.mxu0 0.0
    %1241 = vmatpush1.msra.mxu0 0.0
    %1242 = vmatprep.subr.mxu0 0.0
    %1243 = vmatpush1.msra.mxu0 0.0
    %1244 = vmatprep.subr.mxu0 0.0
    %1245 = vmatpush1.msra.mxu0 0.0
    %1246 = vmatprep.subr.mxu0 0.0
    %1247 = vmatpush1.msra.mxu0 0.0
    %1248 = vmatprep.subr.mxu0 0.0
    %1249 = vmatpush1.msra.mxu0 0.0
    %1250 = vmatprep.subr.mxu0 0.0
    %1251 = vmatpush1.msra.mxu0 0.0
    %1252 = vmatprep.subr.mxu0 0.0
    %1253 = vmatpush1.msra.mxu0 0.0
    %1254 = vmatprep.subr.mxu0 0.0
    %1255 = vmatpush1.msra.mxu0 0.0
    %1256 = vmatprep.subr.mxu0 0.0
    %1257 = vmatpush1.msra.mxu0 0.0
    %1258 = vmatprep.subr.mxu0 0.0
    %1259 = vmatpush1.msra.mxu0 0.0
    %1260 = vmatprep.subr.mxu0 0.0
    %1261 = vmatpush1.msra.mxu0 0.0
    %1262 = vmatprep.subr.mxu0 0.0
    %1263 = vmatpush1.msra.mxu0 0.0
    %1264 = vmatprep.subr.mxu0 0.0
    %1265 = vmatpush1.msra.mxu0 0.0
    %1266 = vmatprep.subr.mxu0 0.0
    %1267 = vmatpush1.msra.mxu0 0.0
    %1268 = vmatprep.subr.mxu0 0.0
    %1269 = vmatpush1.msra.mxu0 0.0
    %1270 = vmatprep.subr.mxu0 0.0
    %1271 = vmatpush1.msra.mxu0 0.0
    %1272 = vmatprep.subr.mxu0 0.0
    %1273 = vmatpush1.msra.mxu0 0.0
    %1274 = vmatprep.subr.mxu0 0.0
    %1275 = vmatpush1.msra.mxu0 0.0
    %1276 = vmatprep.subr.mxu0 0.0
    %1277 = vmatpush1.msra.mxu0 0.0
    %1278 = vmatprep.subr.mxu0 0.0
    %1279 = vmatpush1.msra.mxu0 0.0
    %1280 = vmatprep.subr.mxu0 0.0
    %1281 = vmatpush1.msra.mxu0 0.0
    %1282 = vmatprep.subr.mxu0 0.0
    %1283 = vmatpush1.msra.mxu0 0.0
    %1284 = vmatprep.subr.mxu0 0.0
    %1285 = vmatpush1.msra.mxu0 0.0
    %1286 = vmatprep.mubr.f32.mxu0 0.0
    %1287 = vmatmul.mubr.f32.gmra.mrb[0].mxu0 %v1220
    %v1288 = vpop.f32.mrb[0].mxu0
    %v1289 = vadd.f32 0.0, %v1288
    %v1290 = vpop.f32.mrb[0].mxu0
    %1291 = vdwg.mxu0
    %v1292 = vadd.f32 %v1115, %v1289
    %v1293 = vmul.f32 %v1292, 2.0
    %v1294 = vsel %vm61, %v1293, %v1292
    %v1295 = vxor.u32 %v1294, 2147483648
    %v1296 = vmul.f32 %v1295, 1.442695
    %v1297 = vpow.pop %v1296
    %v1298 = vadd.f32 %v1297, 1.0
    %v1299 = vrcp.pop %v1298
    %v1300 = vmul.f32 1.0, %v1299
    %v1301 = vmul.f32 %v1300, 2.0
    %v1302 = vsub.f32 %v1301, 1.0
    %v1303 = vsel %vm61, %v1302, %v1300
    %v1304 = vmul.f32 %v1303, %v1210
    %1306 = vrot.lane.b32.xlu0 %v1303, 64
    %v1307 = vpop.permute.xlu0 %1306
    %v1309 = vmul.f32 %v1303, %v1307
    %1311 = vrot.lane.b32.xlu0 %v1309, 32
    %v1312 = vpop.permute.xlu0 %1311
    %v1314 = vadd.f32 %v1304, %v1312
    %v1315 = vtanh.pop %v1314
    %1317 = vrot.lane.b32.xlu0 %v1315, 64
    %v1318 = vpop.permute.xlu0 %1317
    %v1320 = vmul.f32 %v1303, %v1318
    %1322 = vrot.lane.b32.xlu0 %v1320, 32
    %v1323 = vpop.permute.xlu0 %1322
    %v1324 = vsel %vm201, %v1323, 0
    %1326 = vmatprep.subr.mxu0 0.0
    %1327 = vmatpush1.msra.mxu0 %v53
    %1328 = vmatprep.subr.mxu0 0.0
    %1329 = vmatpush1.msra.mxu0 %v54
    %1330 = vmatprep.subr.mxu0 0.0
    %1331 = vmatpush1.msra.mxu0 %v55
    %1332 = vmatprep.subr.mxu0 0.0
    %1333 = vmatpush1.msra.mxu0 %v56
    %1334 = vmatprep.subr.mxu0 0.0
    %1335 = vmatpush1.msra.mxu0 0.0
    %1336 = vmatprep.subr.mxu0 0.0
    %1337 = vmatpush1.msra.mxu0 0.0
    %1338 = vmatprep.subr.mxu0 0.0
    %1339 = vmatpush1.msra.mxu0 0.0
    %1340 = vmatprep.subr.mxu0 0.0
    %1341 = vmatpush1.msra.mxu0 0.0
    %1342 = vmatprep.subr.mxu0 0.0
    %1343 = vmatpush1.msra.mxu0 0.0
    %1344 = vmatprep.subr.mxu0 0.0
    %1345 = vmatpush1.msra.mxu0 0.0
    %1346 = vmatprep.subr.mxu0 0.0
    %1347 = vmatpush1.msra.mxu0 0.0
    %1348 = vmatprep.subr.mxu0 0.0
    %1349 = vmatpush1.msra.mxu0 0.0
    %1350 = vmatprep.subr.mxu0 0.0
    %1351 = vmatpush1.msra.mxu0 0.0
    %1352 = vmatprep.subr.mxu0 0.0
    %1353 = vmatpush1.msra.mxu0 0.0
    %1354 = vmatprep.subr.mxu0 0.0
    %1355 = vmatpush1.msra.mxu0 0.0
    %1356 = vmatprep.subr.mxu0 0.0
    %1357 = vmatpush1.msra.mxu0 0.0
    %1358 = vmatprep.subr.mxu0 0.0
    %1359 = vmatpush1.msra.mxu0 0.0
    %1360 = vmatprep.subr.mxu0 0.0
    %1361 = vmatpush1.msra.mxu0 0.0
    %1362 = vmatprep.subr.mxu0 0.0
    %1363 = vmatpush1.msra.mxu0 0.0
    %1364 = vmatprep.subr.mxu0 0.0
    %1365 = vmatpush1.msra.mxu0 0.0
    %1366 = vmatprep.subr.mxu0 0.0
    %1367 = vmatpush1.msra.mxu0 0.0
    %1368 = vmatprep.subr.mxu0 0.0
    %1369 = vmatpush1.msra.mxu0 0.0
    %1370 = vmatprep.subr.mxu0 0.0
    %1371 = vmatpush1.msra.mxu0 0.0
    %1372 = vmatprep.subr.mxu0 0.0
    %1373 = vmatpush1.msra.mxu0 0.0
    %1374 = vmatprep.subr.mxu0 0.0
    %1375 = vmatpush1.msra.mxu0 0.0
    %1376 = vmatprep.subr.mxu0 0.0
    %1377 = vmatpush1.msra.mxu0 0.0
    %1378 = vmatprep.subr.mxu0 0.0
    %1379 = vmatpush1.msra.mxu0 0.0
    %1380 = vmatprep.subr.mxu0 0.0
    %1381 = vmatpush1.msra.mxu0 0.0
    %1382 = vmatprep.subr.mxu0 0.0
    %1383 = vmatpush1.msra.mxu0 0.0
    %1384 = vmatprep.subr.mxu0 0.0
    %1385 = vmatpush1.msra.mxu0 0.0
    %1386 = vmatprep.subr.mxu0 0.0
    %1387 = vmatpush1.msra.mxu0 0.0
    %1388 = vmatprep.subr.mxu0 0.0
    %1389 = vmatpush1.msra.mxu0 0.0
    %1390 = vmatprep.mubr.f32.mxu0 0.0
    %1391 = vmatmul.mubr.f32.gmra.mrb[0].mxu0 %v1324
    %v1392 = vpop.f32.mrb[0].mxu0
    %v1393 = vadd.f32 0.0, %v1392
    %v1394 = vpop.f32.mrb[0].mxu0
    %1395 = vdwg.mxu0
    %v1396 = vadd.f32 %v1115, %v1393
    %v1397 = vmul.f32 %v1396, 2.0
    %v1398 = vsel %vm61, %v1397, %v1396
    %v1399 = vxor.u32 %v1398, 2147483648
    %v1400 = vmul.f32 %v1399, 1.442695
    %v1401 = vpow.pop %v1400
    %v1402 = vadd.f32 %v1401, 1.0
    %v1403 = vrcp.pop %v1402
    %v1404 = vmul.f32 1.0, %v1403
    %v1405 = vmul.f32 %v1404, 2.0
    %v1406 = vsub.f32 %v1405, 1.0
    %v1407 = vsel %vm61, %v1406, %v1404
    %v1408 = vmul.f32 %v1407, %v1314
    %1410 = vrot.lane.b32.xlu0 %v1407, 64
    %v1411 = vpop.permute.xlu0 %1410
    %v1413 = vmul.f32 %v1407, %v1411
    %1415 = vrot.lane.b32.xlu0 %v1413, 32
    %v1416 = vpop.permute.xlu0 %1415
    %v1418 = vadd.f32 %v1408, %v1416
    %v1419 = vtanh.pop %v1418
    %1421 = vrot.lane.b32.xlu0 %v1419, 64
    %v1422 = vpop.permute.xlu0 %1421
    %v1424 = vmul.f32 %v1407, %v1422
    %1426 = vrot.lane.b32.xlu0 %v1424, 32
    %v1427 = vpop.permute.xlu0 %1426
    %v1428 = vsel %vm201, %v1427, 0
    %1430 = vmatprep.subr.mxu0 0.0
    %1431 = vmatpush1.msra.mxu0 %v53
    %1432 = vmatprep.subr.mxu0 0.0
    %1433 = vmatpush1.msra.mxu0 %v54
    %1434 = vmatprep.subr.mxu0 0.0
    %1435 = vmatpush1.msra.mxu0 %v55
    %1436 = vmatprep.subr.mxu0 0.0
    %1437 = vmatpush1.msra.mxu0 %v56
    %1438 = vmatprep.subr.mxu0 0.0
    %1439 = vmatpush1.msra.mxu0 0.0
    %1440 = vmatprep.subr.mxu0 0.0
    %1441 = vmatpush1.msra.mxu0 0.0
    %1442 = vmatprep.subr.mxu0 0.0
    %1443 = vmatpush1.msra.mxu0 0.0
    %1444 = vmatprep.subr.mxu0 0.0
    %1445 = vmatpush1.msra.mxu0 0.0
    %1446 = vmatprep.subr.mxu0 0.0
    %1447 = vmatpush1.msra.mxu0 0.0
    %1448 = vmatprep.subr.mxu0 0.0
    %1449 = vmatpush1.msra.mxu0 0.0
    %1450 = vmatprep.subr.mxu0 0.0
    %1451 = vmatpush1.msra.mxu0 0.0
    %1452 = vmatprep.subr.mxu0 0.0
    %1453 = vmatpush1.msra.mxu0 0.0
    %1454 = vmatprep.subr.mxu0 0.0
    %1455 = vmatpush1.msra.mxu0 0.0
    %1456 = vmatprep.subr.mxu0 0.0
    %1457 = vmatpush1.msra.mxu0 0.0
    %1458 = vmatprep.subr.mxu0 0.0
    %1459 = vmatpush1.msra.mxu0 0.0
    %1460 = vmatprep.subr.mxu0 0.0
    %1461 = vmatpush1.msra.mxu0 0.0
    %1462 = vmatprep.subr.mxu0 0.0
    %1463 = vmatpush1.msra.mxu0 0.0
    %1464 = vmatprep.subr.mxu0 0.0
    %1465 = vmatpush1.msra.mxu0 0.0
    %1466 = vmatprep.subr.mxu0 0.0
    %1467 = vmatpush1.msra.mxu0 0.0
    %1468 = vmatprep.subr.mxu0 0.0
    %1469 = vmatpush1.msra.mxu0 0.0
    %1470 = vmatprep.subr.mxu0 0.0
    %1471 = vmatpush1.msra.mxu0 0.0
    %1472 = vmatprep.subr.mxu0 0.0
    %1473 = vmatpush1.msra.mxu0 0.0
    %1474 = vmatprep.subr.mxu0 0.0
    %1475 = vmatpush1.msra.mxu0 0.0
    %1476 = vmatprep.subr.mxu0 0.0
    %1477 = vmatpush1.msra.mxu0 0.0
    %1478 = vmatprep.subr.mxu0 0.0
    %1479 = vmatpush1.msra.mxu0 0.0
    %1480 = vmatprep.subr.mxu0 0.0
    %1481 = vmatpush1.msra.mxu0 0.0
    %1482 = vmatprep.subr.mxu0 0.0
    %1483 = vmatpush1.msra.mxu0 0.0
    %1484 = vmatprep.subr.mxu0 0.0
    %1485 = vmatpush1.msra.mxu0 0.0
    %1486 = vmatprep.subr.mxu0 0.0
    %1487 = vmatpush1.msra.mxu0 0.0
    %1488 = vmatprep.subr.mxu0 0.0
    %1489 = vmatpush1.msra.mxu0 0.0
    %1490 = vmatprep.subr.mxu0 0.0
    %1491 = vmatpush1.msra.mxu0 0.0
    %1492 = vmatprep.subr.mxu0 0.0
    %1493 = vmatpush1.msra.mxu0 0.0
    %1494 = vmatprep.mubr.f32.mxu0 0.0
    %1495 = vmatmul.mubr.f32.gmra.mrb[0].mxu0 %v1428
    %v1496 = vpop.f32.mrb[0].mxu0
    %v1497 = vadd.f32 0.0, %v1496
    %v1498 = vpop.f32.mrb[0].mxu0
    %1499 = vdwg.mxu0
    %v1500 = vadd.f32 %v1115, %v1497
    %v1501 = vmul.f32 %v1500, 2.0
    %v1502 = vsel %vm61, %v1501, %v1500
    %v1503 = vxor.u32 %v1502, 2147483648
    %v1504 = vmul.f32 %v1503, 1.442695
    %v1505 = vpow.pop %v1504
    %v1506 = vadd.f32 %v1505, 1.0
    %v1507 = vrcp.pop %v1506
    %v1508 = vmul.f32 1.0, %v1507
    %v1509 = vmul.f32 %v1508, 2.0
    %v1510 = vsub.f32 %v1509, 1.0
    %v1511 = vsel %vm61, %v1510, %v1508
    %v1512 = vmul.f32 %v1511, %v1418
    %1514 = vrot.lane.b32.xlu0 %v1511, 64
    %v1515 = vpop.permute.xlu0 %1514
    %v1517 = vmul.f32 %v1511, %v1515
    %1519 = vrot.lane.b32.xlu0 %v1517, 32
    %v1520 = vpop.permute.xlu0 %1519
    %v1522 = vadd.f32 %v1512, %v1520
    %v1523 = vtanh.pop %v1522
    %1525 = vrot.lane.b32.xlu0 %v1523, 64
    %v1526 = vpop.permute.xlu0 %1525
    %v1528 = vmul.f32 %v1511, %v1526
    %1530 = vrot.lane.b32.xlu0 %v1528, 32
    %v1531 = vpop.permute.xlu0 %1530
    %v1532 = vsel %vm201, %v1531, 0
    %1534 = vmatprep.subr.mxu0 0.0
    %1535 = vmatpush1.msra.mxu0 %v53
    %1536 = vmatprep.subr.mxu0 0.0
    %1537 = vmatpush1.msra.mxu0 %v54
    %1538 = vmatprep.subr.mxu0 0.0
    %1539 = vmatpush1.msra.mxu0 %v55
    %1540 = vmatprep.subr.mxu0 0.0
    %1541 = vmatpush1.msra.mxu0 %v56
    %1542 = vmatprep.subr.mxu0 0.0
    %1543 = vmatpush1.msra.mxu0 0.0
    %1544 = vmatprep.subr.mxu0 0.0
    %1545 = vmatpush1.msra.mxu0 0.0
    %1546 = vmatprep.subr.mxu0 0.0
    %1547 = vmatpush1.msra.mxu0 0.0
    %1548 = vmatprep.subr.mxu0 0.0
    %1549 = vmatpush1.msra.mxu0 0.0
    %1550 = vmatprep.subr.mxu0 0.0
    %1551 = vmatpush1.msra.mxu0 0.0
    %1552 = vmatprep.subr.mxu0 0.0
    %1553 = vmatpush1.msra.mxu0 0.0
    %1554 = vmatprep.subr.mxu0 0.0
    %1555 = vmatpush1.msra.mxu0 0.0
    %1556 = vmatprep.subr.mxu0 0.0
    %1557 = vmatpush1.msra.mxu0 0.0
    %1558 = vmatprep.subr.mxu0 0.0
    %1559 = vmatpush1.msra.mxu0 0.0
    %1560 = vmatprep.subr.mxu0 0.0
    %1561 = vmatpush1.msra.mxu0 0.0
    %1562 = vmatprep.subr.mxu0 0.0
    %1563 = vmatpush1.msra.mxu0 0.0
    %1564 = vmatprep.subr.mxu0 0.0
    %1565 = vmatpush1.msra.mxu0 0.0
    %1566 = vmatprep.subr.mxu0 0.0
    %1567 = vmatpush1.msra.mxu0 0.0
    %1568 = vmatprep.subr.mxu0 0.0
    %1569 = vmatpush1.msra.mxu0 0.0
    %1570 = vmatprep.subr.mxu0 0.0
    %1571 = vmatpush1.msra.mxu0 0.0
    %1572 = vmatprep.subr.mxu0 0.0
    %1573 = vmatpush1.msra.mxu0 0.0
    %1574 = vmatprep.subr.mxu0 0.0
    %1575 = vmatpush1.msra.mxu0 0.0
    %1576 = vmatprep.subr.mxu0 0.0
    %1577 = vmatpush1.msra.mxu0 0.0
    %1578 = vmatprep.subr.mxu0 0.0
    %1579 = vmatpush1.msra.mxu0 0.0
    %1580 = vmatprep.subr.mxu0 0.0
    %1581 = vmatpush1.msra.mxu0 0.0
    %1582 = vmatprep.subr.mxu0 0.0
    %1583 = vmatpush1.msra.mxu0 0.0
    %1584 = vmatprep.subr.mxu0 0.0
    %1585 = vmatpush1.msra.mxu0 0.0
    %1586 = vmatprep.subr.mxu0 0.0
    %1587 = vmatpush1.msra.mxu0 0.0
    %1588 = vmatprep.subr.mxu0 0.0
    %1589 = vmatpush1.msra.mxu0 0.0
    %1590 = vmatprep.subr.mxu0 0.0
    %1591 = vmatpush1.msra.mxu0 0.0
    %1592 = vmatprep.subr.mxu0 0.0
    %1593 = vmatpush1.msra.mxu0 0.0
    %1594 = vmatprep.subr.mxu0 0.0
    %1595 = vmatpush1.msra.mxu0 0.0
    %1596 = vmatprep.subr.mxu0 0.0
    %1597 = vmatpush1.msra.mxu0 0.0
    %1598 = vmatprep.mubr.f32.mxu0 0.0
    %1599 = vmatmul.mubr.f32.gmra.mrb[0].mxu0 %v1532
    %v1600 = vpop.f32.mrb[0].mxu0
    %v1601 = vadd.f32 0.0, %v1600
    %v1602 = vpop.f32.mrb[0].mxu0
    %1603 = vdwg.mxu0
    %v1604 = vadd.f32 %v1115, %v1601
    %v1605 = vmul.f32 %v1604, 2.0
    %v1606 = vsel %vm61, %v1605, %v1604
    %v1607 = vxor.u32 %v1606, 2147483648
    %v1608 = vmul.f32 %v1607, 1.442695
    %v1609 = vpow.pop %v1608
    %v1610 = vadd.f32 %v1609, 1.0
    %v1611 = vrcp.pop %v1610
    %v1612 = vmul.f32 1.0, %v1611
    %v1613 = vmul.f32 %v1612, 2.0
    %v1614 = vsub.f32 %v1613, 1.0
    %v1615 = vsel %vm61, %v1614, %v1612
    %v1616 = vmul.f32 %v1615, %v1522
    %1618 = vrot.lane.b32.xlu0 %v1615, 64
    %v1619 = vpop.permute.xlu0 %1618
    %v1621 = vmul.f32 %v1615, %v1619
    %1623 = vrot.lane.b32.xlu0 %v1621, 32
    %v1624 = vpop.permute.xlu0 %1623
    %v1626 = vadd.f32 %v1616, %v1624
    %v1627 = vtanh.pop %v1626
    %1629 = vrot.lane.b32.xlu0 %v1627, 64
    %v1630 = vpop.permute.xlu0 %1629
    %v1632 = vmul.f32 %v1615, %v1630
    %1634 = vrot.lane.b32.xlu0 %v1632, 32
    %v1635 = vpop.permute.xlu0 %1634
    %v1636 = vsel %vm201, %v1635, 0
    %1638 = vmatprep.subr.mxu0 0.0
    %1639 = vmatpush1.msra.mxu0 %v53
    %1640 = vmatprep.subr.mxu0 0.0
    %1641 = vmatpush1.msra.mxu0 %v54
    %1642 = vmatprep.subr.mxu0 0.0
    %1643 = vmatpush1.msra.mxu0 %v55
    %1644 = vmatprep.subr.mxu0 0.0
    %1645 = vmatpush1.msra.mxu0 %v56
    %1646 = vmatprep.subr.mxu0 0.0
    %1647 = vmatpush1.msra.mxu0 0.0
    %1648 = vmatprep.subr.mxu0 0.0
    %1649 = vmatpush1.msra.mxu0 0.0
    %1650 = vmatprep.subr.mxu0 0.0
    %1651 = vmatpush1.msra.mxu0 0.0
    %1652 = vmatprep.subr.mxu0 0.0
    %1653 = vmatpush1.msra.mxu0 0.0
    %1654 = vmatprep.subr.mxu0 0.0
    %1655 = vmatpush1.msra.mxu0 0.0
    %1656 = vmatprep.subr.mxu0 0.0
    %1657 = vmatpush1.msra.mxu0 0.0
    %1658 = vmatprep.subr.mxu0 0.0
    %1659 = vmatpush1.msra.mxu0 0.0
    %1660 = vmatprep.subr.mxu0 0.0
    %1661 = vmatpush1.msra.mxu0 0.0
    %1662 = vmatprep.subr.mxu0 0.0
    %1663 = vmatpush1.msra.mxu0 0.0
    %1664 = vmatprep.subr.mxu0 0.0
    %1665 = vmatpush1.msra.mxu0 0.0
    %1666 = vmatprep.subr.mxu0 0.0
    %1667 = vmatpush1.msra.mxu0 0.0
    %1668 = vmatprep.subr.mxu0 0.0
    %1669 = vmatpush1.msra.mxu0 0.0
    %1670 = vmatprep.subr.mxu0 0.0
    %1671 = vmatpush1.msra.mxu0 0.0
    %1672 = vmatprep.subr.mxu0 0.0
    %1673 = vmatpush1.msra.mxu0 0.0
    %1674 = vmatprep.subr.mxu0 0.0
    %1675 = vmatpush1.msra.mxu0 0.0
    %1676 = vmatprep.subr.mxu0 0.0
    %1677 = vmatpush1.msra.mxu0 0.0
    %1678 = vmatprep.subr.mxu0 0.0
    %1679 = vmatpush1.msra.mxu0 0.0
    %1680 = vmatprep.subr.mxu0 0.0
    %1681 = vmatpush1.msra.mxu0 0.0
    %1682 = vmatprep.subr.mxu0 0.0
    %1683 = vmatpush1.msra.mxu0 0.0
    %1684 = vmatprep.subr.mxu0 0.0
    %1685 = vmatpush1.msra.mxu0 0.0
    %1686 = vmatprep.subr.mxu0 0.0
    %1687 = vmatpush1.msra.mxu0 0.0
    %1688 = vmatprep.subr.mxu0 0.0
    %1689 = vmatpush1.msra.mxu0 0.0
    %1690 = vmatprep.subr.mxu0 0.0
    %1691 = vmatpush1.msra.mxu0 0.0
    %1692 = vmatprep.subr.mxu0 0.0
    %1693 = vmatpush1.msra.mxu0 0.0
    %1694 = vmatprep.subr.mxu0 0.0
    %1695 = vmatpush1.msra.mxu0 0.0
    %1696 = vmatprep.subr.mxu0 0.0
    %1697 = vmatpush1.msra.mxu0 0.0
    %1698 = vmatprep.subr.mxu0 0.0
    %1699 = vmatpush1.msra.mxu0 0.0
    %1700 = vmatprep.subr.mxu0 0.0
    %1701 = vmatpush1.msra.mxu0 0.0
    %1702 = vmatprep.mubr.f32.mxu0 0.0
    %1703 = vmatmul.mubr.f32.gmra.mrb[0].mxu0 %v1636
    %v1704 = vpop.f32.mrb[0].mxu0
    %v1705 = vadd.f32 0.0, %v1704
    %v1706 = vpop.f32.mrb[0].mxu0
    %1707 = vdwg.mxu0
    %v1708 = vadd.f32 %v1115, %v1705
    %v1709 = vmul.f32 %v1708, 2.0
    %v1710 = vsel %vm61, %v1709, %v1708
    %v1711 = vxor.u32 %v1710, 2147483648
    %v1712 = vmul.f32 %v1711, 1.442695
    %v1713 = vpow.pop %v1712
    %v1714 = vadd.f32 %v1713, 1.0
    %v1715 = vrcp.pop %v1714
    %v1716 = vmul.f32 1.0, %v1715
    %v1717 = vmul.f32 %v1716, 2.0
    %v1718 = vsub.f32 %v1717, 1.0
    %v1719 = vsel %vm61, %v1718, %v1716
    %v1720 = vmul.f32 %v1719, %v1626
    %1722 = vrot.lane.b32.xlu0 %v1719, 64
    %v1723 = vpop.permute.xlu0 %1722
    %v1725 = vmul.f32 %v1719, %v1723
    %1727 = vrot.lane.b32.xlu0 %v1725, 32
    %v1728 = vpop.permute.xlu0 %1727
    %v1730 = vadd.f32 %v1720, %v1728
    %v1731 = vtanh.pop %v1730
    %1733 = vrot.lane.b32.xlu0 %v1731, 64
    %v1734 = vpop.permute.xlu0 %1733
    %v1736 = vmul.f32 %v1719, %v1734
    %1738 = vrot.lane.b32.xlu0 %v1736, 32
    %v1739 = vpop.permute.xlu0 %1738
    %v1740 = vsel %vm201, %v1739, 0
    %1742 = vmatprep.subr.mxu0 0.0
    %1743 = vmatpush1.msra.mxu0 %v53
    %1744 = vmatprep.subr.mxu0 0.0
    %1745 = vmatpush1.msra.mxu0 %v54
    %1746 = vmatprep.subr.mxu0 0.0
    %1747 = vmatpush1.msra.mxu0 %v55
    %1748 = vmatprep.subr.mxu0 0.0
    %1749 = vmatpush1.msra.mxu0 %v56
    %1750 = vmatprep.subr.mxu0 0.0
    %1751 = vmatpush1.msra.mxu0 0.0
    %1752 = vmatprep.subr.mxu0 0.0
    %1753 = vmatpush1.msra.mxu0 0.0
    %1754 = vmatprep.subr.mxu0 0.0
    %1755 = vmatpush1.msra.mxu0 0.0
    %1756 = vmatprep.subr.mxu0 0.0
    %1757 = vmatpush1.msra.mxu0 0.0
    %1758 = vmatprep.subr.mxu0 0.0
    %1759 = vmatpush1.msra.mxu0 0.0
    %1760 = vmatprep.subr.mxu0 0.0
    %1761 = vmatpush1.msra.mxu0 0.0
    %1762 = vmatprep.subr.mxu0 0.0
    %1763 = vmatpush1.msra.mxu0 0.0
    %1764 = vmatprep.subr.mxu0 0.0
    %1765 = vmatpush1.msra.mxu0 0.0
    %1766 = vmatprep.subr.mxu0 0.0
    %1767 = vmatpush1.msra.mxu0 0.0
    %1768 = vmatprep.subr.mxu0 0.0
    %1769 = vmatpush1.msra.mxu0 0.0
    %1770 = vmatprep.subr.mxu0 0.0
    %1771 = vmatpush1.msra.mxu0 0.0
    %1772 = vmatprep.subr.mxu0 0.0
    %1773 = vmatpush1.msra.mxu0 0.0
    %1774 = vmatprep.subr.mxu0 0.0
    %1775 = vmatpush1.msra.mxu0 0.0
    %1776 = vmatprep.subr.mxu0 0.0
    %1777 = vmatpush1.msra.mxu0 0.0
    %1778 = vmatprep.subr.mxu0 0.0
    %1779 = vmatpush1.msra.mxu0 0.0
    %1780 = vmatprep.subr.mxu0 0.0
    %1781 = vmatpush1.msra.mxu0 0.0
    %1782 = vmatprep.subr.mxu0 0.0
    %1783 = vmatpush1.msra.mxu0 0.0
    %1784 = vmatprep.subr.mxu0 0.0
    %1785 = vmatpush1.msra.mxu0 0.0
    %1786 = vmatprep.subr.mxu0 0.0
    %1787 = vmatpush1.msra.mxu0 0.0
    %1788 = vmatprep.subr.mxu0 0.0
    %1789 = vmatpush1.msra.mxu0 0.0
    %1790 = vmatprep.subr.mxu0 0.0
    %1791 = vmatpush1.msra.mxu0 0.0
    %1792 = vmatprep.subr.mxu0 0.0
    %1793 = vmatpush1.msra.mxu0 0.0
    %1794 = vmatprep.subr.mxu0 0.0
    %1795 = vmatpush1.msra.mxu0 0.0
    %1796 = vmatprep.subr.mxu0 0.0
    %1797 = vmatpush1.msra.mxu0 0.0
    %1798 = vmatprep.subr.mxu0 0.0
    %1799 = vmatpush1.msra.mxu0 0.0
    %1800 = vmatprep.subr.mxu0 0.0
    %1801 = vmatpush1.msra.mxu0 0.0
    %1802 = vmatprep.subr.mxu0 0.0
    %1803 = vmatpush1.msra.mxu0 0.0
    %1804 = vmatprep.subr.mxu0 0.0
    %1805 = vmatpush1.msra.mxu0 0.0
    %1806 = vmatprep.mubr.f32.mxu0 0.0
    %1807 = vmatmul.mubr.f32.gmra.mrb[0].mxu0 %v1740
    %v1808 = vpop.f32.mrb[0].mxu0
    %v1809 = vadd.f32 0.0, %v1808
    %v1810 = vpop.f32.mrb[0].mxu0
    %1811 = vdwg.mxu0
    %v1812 = vadd.f32 %v1115, %v1809
    %v1813 = vmul.f32 %v1812, 2.0
    %v1814 = vsel %vm61, %v1813, %v1812
    %v1815 = vxor.u32 %v1814, 2147483648
    %v1816 = vmul.f32 %v1815, 1.442695
    %v1817 = vpow.pop %v1816
    %v1818 = vadd.f32 %v1817, 1.0
    %v1819 = vrcp.pop %v1818
    %v1820 = vmul.f32 1.0, %v1819
    %v1821 = vmul.f32 %v1820, 2.0
    %v1822 = vsub.f32 %v1821, 1.0
    %v1823 = vsel %vm61, %v1822, %v1820
    %v1824 = vmul.f32 %v1823, %v1730
    %1826 = vrot.lane.b32.xlu0 %v1823, 64
    %v1827 = vpop.permute.xlu0 %1826
    %v1829 = vmul.f32 %v1823, %v1827
    %1831 = vrot.lane.b32.xlu0 %v1829, 32
    %v1832 = vpop.permute.xlu0 %1831
    %v1834 = vadd.f32 %v1824, %v1832
    %v1835 = vtanh.pop %v1834
    %1837 = vrot.lane.b32.xlu0 %v1835, 64
    %v1838 = vpop.permute.xlu0 %1837
    %v1840 = vmul.f32 %v1823, %v1838
    %1842 = vrot.lane.b32.xlu0 %v1840, 32
    %v1843 = vpop.permute.xlu0 %1842
    %v1844 = vsel %vm201, %v1843, 0
    %1846 = vmatprep.subr.mxu0 0.0
    %1847 = vmatpush1.msra.mxu0 %v53
    %1848 = vmatprep.subr.mxu0 0.0
    %1849 = vmatpush1.msra.mxu0 %v54
    %1850 = vmatprep.subr.mxu0 0.0
    %1851 = vmatpush1.msra.mxu0 %v55
    %1852 = vmatprep.subr.mxu0 0.0
    %1853 = vmatpush1.msra.mxu0 %v56
    %1854 = vmatprep.subr.mxu0 0.0
    %1855 = vmatpush1.msra.mxu0 0.0
    %1856 = vmatprep.subr.mxu0 0.0
    %1857 = vmatpush1.msra.mxu0 0.0
    %1858 = vmatprep.subr.mxu0 0.0
    %1859 = vmatpush1.msra.mxu0 0.0
    %1860 = vmatprep.subr.mxu0 0.0
    %1861 = vmatpush1.msra.mxu0 0.0
    %1862 = vmatprep.subr.mxu0 0.0
    %1863 = vmatpush1.msra.mxu0 0.0
    %1864 = vmatprep.subr.mxu0 0.0
    %1865 = vmatpush1.msra.mxu0 0.0
    %1866 = vmatprep.subr.mxu0 0.0
    %1867 = vmatpush1.msra.mxu0 0.0
    %1868 = vmatprep.subr.mxu0 0.0
    %1869 = vmatpush1.msra.mxu0 0.0
    %1870 = vmatprep.subr.mxu0 0.0
    %1871 = vmatpush1.msra.mxu0 0.0
    %1872 = vmatprep.subr.mxu0 0.0
    %1873 = vmatpush1.msra.mxu0 0.0
    %1874 = vmatprep.subr.mxu0 0.0
    %1875 = vmatpush1.msra.mxu0 0.0
    %1876 = vmatprep.subr.mxu0 0.0
    %1877 = vmatpush1.msra.mxu0 0.0
    %1878 = vmatprep.subr.mxu0 0.0
    %1879 = vmatpush1.msra.mxu0 0.0
    %1880 = vmatprep.subr.mxu0 0.0
    %1881 = vmatpush1.msra.mxu0 0.0
    %1882 = vmatprep.subr.mxu0 0.0
    %1883 = vmatpush1.msra.mxu0 0.0
    %1884 = vmatprep.subr.mxu0 0.0
    %1885 = vmatpush1.msra.mxu0 0.0
    %1886 = vmatprep.subr.mxu0 0.0
    %1887 = vmatpush1.msra.mxu0 0.0
    %1888 = vmatprep.subr.mxu0 0.0
    %1889 = vmatpush1.msra.mxu0 0.0
    %1890 = vmatprep.subr.mxu0 0.0
    %1891 = vmatpush1.msra.mxu0 0.0
    %1892 = vmatprep.subr.mxu0 0.0
    %1893 = vmatpush1.msra.mxu0 0.0
    %1894 = vmatprep.subr.mxu0 0.0
    %1895 = vmatpush1.msra.mxu0 0.0
    %1896 = vmatprep.subr.mxu0 0.0
    %1897 = vmatpush1.msra.mxu0 0.0
    %1898 = vmatprep.subr.mxu0 0.0
    %1899 = vmatpush1.msra.mxu0 0.0
    %1900 = vmatprep.subr.mxu0 0.0
    %1901 = vmatpush1.msra.mxu0 0.0
    %1902 = vmatprep.subr.mxu0 0.0
    %1903 = vmatpush1.msra.mxu0 0.0
    %1904 = vmatprep.subr.mxu0 0.0
    %1905 = vmatpush1.msra.mxu0 0.0
    %1906 = vmatprep.subr.mxu0 0.0
    %1907 = vmatpush1.msra.mxu0 0.0
    %1908 = vmatprep.subr.mxu0 0.0
    %1909 = vmatpush1.msra.mxu0 0.0
    %1910 = vmatprep.mubr.f32.mxu0 0.0
    %1911 = vmatmul.mubr.f32.gmra.mrb[0].mxu0 %v1844
    %v1912 = vpop.f32.mrb[0].mxu0
    %v1913 = vadd.f32 0.0, %v1912
    %v1914 = vpop.f32.mrb[0].mxu0
    %1915 = vdwg.mxu0
    %v1916 = vadd.f32 %v1115, %v1913
    %v1917 = vmul.f32 %v1916, 2.0
    %v1918 = vsel %vm61, %v1917, %v1916
    %v1919 = vxor.u32 %v1918, 2147483648
    %v1920 = vmul.f32 %v1919, 1.442695
    %v1921 = vpow.pop %v1920
    %v1922 = vadd.f32 %v1921, 1.0
    %v1923 = vrcp.pop %v1922
    %v1924 = vmul.f32 1.0, %v1923
    %v1925 = vmul.f32 %v1924, 2.0
    %v1926 = vsub.f32 %v1925, 1.0
    %v1927 = vsel %vm61, %v1926, %v1924
    %v1928 = vmul.f32 %v1927, %v1834
    %1930 = vrot.lane.b32.xlu0 %v1927, 64
    %v1931 = vpop.permute.xlu0 %1930
    %v1933 = vmul.f32 %v1927, %v1931
    %1935 = vrot.lane.b32.xlu0 %v1933, 32
    %v1936 = vpop.permute.xlu0 %1935
    %v1938 = vadd.f32 %v1928, %v1936
    %v1939 = vtanh.pop %v1938
    %1941 = vrot.lane.b32.xlu0 %v1939, 64
    %v1942 = vpop.permute.xlu0 %1941
    %v1944 = vmul.f32 %v1927, %v1942
    %1946 = vrot.lane.b32.xlu0 %v1320, 64
    %v1947 = vpop.permute.xlu0 %1946
    %1949 = vrot.lane.b32.xlu0 %v1424, 96
    %v1950 = vpop.permute.xlu0 %1949
    %1953 = vrot.lane.b32.xlu0 %v1736, 64
    %v1954 = vpop.permute.xlu0 %1953
    %1956 = vrot.lane.b32.xlu0 %v1840, 96
    %v1957 = vpop.permute.xlu0 %1956
    %v1959 = vsel %vm201, %v1219, %v1947
    %vm1960 = vcmask 523264
    %v1961 = vsel %vm1960, %v1959, %v1950
    %vm1962 = vcmask 785408
    %v1963 = vsel %vm1962, %v1961, %v1528
    %v1964 = vsel %vm201, %v1635, %v1954
    %v1965 = vsel %vm1960, %v1964, %v1957
    %v1966 = vsel %vm1962, %v1965, %v1944
    %v1967 = vld [vmem:[%s7] sm:$0xff]
    %v1968 = vld [vmem:[%s7 + $0x8] sm:$0xff]
    %v1969 = vld [vmem:[%s7 + $0x10] sm:$0xff]
    %v1970 = vld [vmem:[%s7 + $0x18] sm:$0xff]
    %v1971 = vld [vmem:[%s7 + $0x20] sm:$0xff]
    %v1972 = vld [vmem:[%s7 + $0x28] sm:$0xff]
    %v1973 = vld [vmem:[%s7 + $0x30] sm:$0xff]
    %v1974 = vld [vmem:[%s7 + $0x38] sm:$0xff]
    %v1975 = vld [vmem:[%s7 + $0x40] sm:$0xff]
    %v1976 = vld [vmem:[%s7 + $0x48] sm:$0xff]
    %v1977 = vld [vmem:[%s7 + $0x50] sm:$0xff]
    %v1978 = vld [vmem:[%s7 + $0x58] sm:$0xff]
    %v1979 = vld [vmem:[%s7 + $0x60] sm:$0xff]
    %v1980 = vld [vmem:[%s7 + $0x68] sm:$0xff]
    %v1981 = vld [vmem:[%s7 + $0x70] sm:$0xff]
    %v1982 = vld [vmem:[%s7 + $0x78] sm:$0xff]
    %v1983 = vld [vmem:[%s7 + $0x80] sm:$0xff]
    %v1984 = vld [vmem:[%s7 + $0x88] sm:$0xff]
    %v1985 = vld [vmem:[%s7 + $0x90] sm:$0xff]
    %v1986 = vld [vmem:[%s7 + $0x98] sm:$0xff]
    %v1987 = vld [vmem:[%s7 + $0xa0] sm:$0xff]
    %v1988 = vld [vmem:[%s7 + $0xa8] sm:$0xff]
    %v1989 = vld [vmem:[%s7 + $0xb0] sm:$0xff]
    %v1990 = vld [vmem:[%s7 + $0xb8] sm:$0xff]
    %v1991 = vld [vmem:[%s7 + $0xc0] sm:$0xff]
    %v1992 = vld [vmem:[%s7 + $0xc8] sm:$0xff]
    %v1993 = vld [vmem:[%s7 + $0xd0] sm:$0xff]
    %v1994 = vld [vmem:[%s7 + $0xd8] sm:$0xff]
    %v1995 = vld [vmem:[%s7 + $0xe0] sm:$0xff]
    %v1996 = vld [vmem:[%s7 + $0xe8] sm:$0xff]
    %v1997 = vld [vmem:[%s7 + $0xf0] sm:$0xff]
    %v1998 = vld [vmem:[%s7 + $0xf8] sm:$0xff]
    %v1999 = vld [vmem:[%s8] sm:$0x1]
    %v2001 = vlaneseq
    %v2002 = vshrl.u32 %v2001, 7
    %v2003 = vsub.s32 0, %v2002
    %v2004 = vrot.slane %v1999, %v2003
    %2006 = vmatprep.subr.mxu0 0.0
    %2007 = vmatpush1.msra.mxu0 %v1967
    %2008 = vmatprep.subr.mxu0 0.0
    %2009 = vmatpush1.msra.mxu0 %v1968
    %2010 = vmatprep.subr.mxu0 0.0
    %2011 = vmatpush1.msra.mxu0 %v1969
    %2012 = vmatprep.subr.mxu0 0.0
    %2013 = vmatpush1.msra.mxu0 %v1970
    %2014 = vmatprep.subr.mxu0 0.0
    %2015 = vmatpush1.msra.mxu0 %v1971
    %2016 = vmatprep.subr.mxu0 0.0
    %2017 = vmatpush1.msra.mxu0 %v1972
    %2018 = vmatprep.subr.mxu0 0.0
    %2019 = vmatpush1.msra.mxu0 %v1973
    %2020 = vmatprep.subr.mxu0 0.0
    %2021 = vmatpush1.msra.mxu0 %v1974
    %2022 = vmatprep.subr.mxu0 0.0
    %2023 = vmatpush1.msra.mxu0 %v1975
    %2024 = vmatprep.subr.mxu0 0.0
    %2025 = vmatpush1.msra.mxu0 %v1976
    %2026 = vmatprep.subr.mxu0 0.0
    %2027 = vmatpush1.msra.mxu0 %v1977
    %2028 = vmatprep.subr.mxu0 0.0
    %2029 = vmatpush1.msra.mxu0 %v1978
    %2030 = vmatprep.subr.mxu0 0.0
    %2031 = vmatpush1.msra.mxu0 %v1979
    %2032 = vmatprep.subr.mxu0 0.0
    %2033 = vmatpush1.msra.mxu0 %v1980
    %2034 = vmatprep.subr.mxu0 0.0
    %2035 = vmatpush1.msra.mxu0 %v1981
    %2036 = vmatprep.subr.mxu0 0.0
    %2037 = vmatpush1.msra.mxu0 %v1982
    %2038 = vmatprep.subr.mxu0 0.0
    %2039 = vmatpush1.msra.mxu0 %v1983
    %2040 = vmatprep.subr.mxu0 0.0
    %2041 = vmatpush1.msra.mxu0 %v1984
    %2042 = vmatprep.subr.mxu0 0.0
    %2043 = vmatpush1.msra.mxu0 %v1985
    %2044 = vmatprep.subr.mxu0 0.0
    %2045 = vmatpush1.msra.mxu0 %v1986
    %2046 = vmatprep.subr.mxu0 0.0
    %2047 = vmatpush1.msra.mxu0 %v1987
    %2048 = vmatprep.subr.mxu0 0.0
    %2049 = vmatpush1.msra.mxu0 %v1988
    %2050 = vmatprep.subr.mxu0 0.0
    %2051 = vmatpush1.msra.mxu0 %v1989
    %2052 = vmatprep.subr.mxu0 0.0
    %2053 = vmatpush1.msra.mxu0 %v1990
    %2054 = vmatprep.subr.mxu0 0.0
    %2055 = vmatpush1.msra.mxu0 %v1991
    %2056 = vmatprep.subr.mxu0 0.0
    %2057 = vmatpush1.msra.mxu0 %v1992
    %2058 = vmatprep.subr.mxu0 0.0
    %2059 = vmatpush1.msra.mxu0 %v1993
    %2060 = vmatprep.subr.mxu0 0.0
    %2061 = vmatpush1.msra.mxu0 %v1994
    %2062 = vmatprep.subr.mxu0 0.0
    %2063 = vmatpush1.msra.mxu0 %v1995
    %2064 = vmatprep.subr.mxu0 0.0
    %2065 = vmatpush1.msra.mxu0 %v1996
    %2066 = vmatprep.subr.mxu0 0.0
    %2067 = vmatpush1.msra.mxu0 %v1997
    %2068 = vmatprep.subr.mxu0 0.0
    %2069 = vmatpush1.msra.mxu0 %v1998
    %2070 = vmatprep.mubr.f32.mxu0 %v1966
    %2071 = vmatmul.mubr.f32.gmra.mrb[0].mxu0 %v1963
    %v2072 = vpop.f32.mrb[0].mxu0
    %v2073 = vadd.f32 %v2004, %v2072
    %v2074 = vpop.f32.mrb[0].mxu0
    %2075 = vdwg.mxu0
    %2076 = vst [vmem:[%s11] sm:$0xff] %v2073
    %v2077 = vld [vmem:[%s9] sm:$0xff]
    %v2078 = vld [vmem:[%s9 + $0x8] sm:$0xff]
    %v2079 = vld [vmem:[%s9 + $0x10] sm:$0xff]
    %v2080 = vld [vmem:[%s9 + $0x18] sm:$0xff]
    %v2081 = vld [vmem:[%s10] sm:$0x1]
    %v2083 = vlaneseq
    %v2084 = vshrl.u32 %v2083, 7
    %v2085 = vsub.s32 0, %v2084
    %v2086 = vrot.slane %v2081, %v2085
    %2088 = vmatprep.subr.mxu0 0.0
    %2089 = vmatpush1.msra.mxu0 %v2077
    %2090 = vmatprep.subr.mxu0 0.0
    %2091 = vmatpush1.msra.mxu0 %v2078
    %2092 = vmatprep.subr.mxu0 0.0
    %2093 = vmatpush1.msra.mxu0 %v2079
    %2094 = vmatprep.subr.mxu0 0.0
    %2095 = vmatpush1.msra.mxu0 %v2080
    %2096 = vmatprep.subr.mxu0 0.0
    %2097 = vmatpush1.msra.mxu0 0.0
    %2098 = vmatprep.subr.mxu0 0.0
    %2099 = vmatpush1.msra.mxu0 0.0
    %2100 = vmatprep.subr.mxu0 0.0
    %2101 = vmatpush1.msra.mxu0 0.0
    %2102 = vmatprep.subr.mxu0 0.0
    %2103 = vmatpush1.msra.mxu0 0.0
    %2104 = vmatprep.subr.mxu0 0.0
    %2105 = vmatpush1.msra.mxu0 0.0
    %2106 = vmatprep.subr.mxu0 0.0
    %2107 = vmatpush1.msra.mxu0 0.0
    %2108 = vmatprep.subr.mxu0 0.0
    %2109 = vmatpush1.msra.mxu0 0.0
    %2110 = vmatprep.subr.mxu0 0.0
    %2111 = vmatpush1.msra.mxu0 0.0
    %2112 = vmatprep.subr.mxu0 0.0
    %2113 = vmatpush1.msra.mxu0 0.0
    %2114 = vmatprep.subr.mxu0 0.0
    %2115 = vmatpush1.msra.mxu0 0.0
    %2116 = vmatprep.subr.mxu0 0.0
    %2117 = vmatpush1.msra.mxu0 0.0
    %2118 = vmatprep.subr.mxu0 0.0
    %2119 = vmatpush1.msra.mxu0 0.0
    %2120 = vmatprep.subr.mxu0 0.0
    %2121 = vmatpush1.msra.mxu0 0.0
    %2122 = vmatprep.subr.mxu0 0.0
    %2123 = vmatpush1.msra.mxu0 0.0
    %2124 = vmatprep.subr.mxu0 0.0
    %2125 = vmatpush1.msra.mxu0 0.0
    %2126 = vmatprep.subr.mxu0 0.0
    %2127 = vmatpush1.msra.mxu0 0.0
    %2128 = vmatprep.subr.mxu0 0.0
    %2129 = vmatpush1.msra.mxu0 0.0
    %2130 = vmatprep.subr.mxu0 0.0
    %2131 = vmatpush1.msra.mxu0 0.0
    %2132 = vmatprep.subr.mxu0 0.0
    %2133 = vmatpush1.msra.mxu0 0.0
    %2134 = vmatprep.subr.mxu0 0.0
    %2135 = vmatpush1.msra.mxu0 0.0
    %2136 = vmatprep.subr.mxu0 0.0
    %2137 = vmatpush1.msra.mxu0 0.0
    %2138 = vmatprep.subr.mxu0 0.0
    %2139 = vmatpush1.msra.mxu0 0.0
    %2140 = vmatprep.subr.mxu0 0.0
    %2141 = vmatpush1.msra.mxu0 0.0
    %2142 = vmatprep.subr.mxu0 0.0
    %2143 = vmatpush1.msra.mxu0 0.0
    %2144 = vmatprep.subr.mxu0 0.0
    %2145 = vmatpush1.msra.mxu0 0.0
    %2146 = vmatprep.subr.mxu0 0.0
    %2147 = vmatpush1.msra.mxu0 0.0
    %2148 = vmatprep.subr.mxu0 0.0
    %2149 = vmatpush1.msra.mxu0 0.0
    %2150 = vmatprep.subr.mxu0 0.0
    %2151 = vmatpush1.msra.mxu0 0.0
    %2152 = vmatprep.mubr.f32.mxu0 0.0
    %2153 = vmatmul.mubr.f32.gmra.mrb[0].mxu0 %v1046
    %v2154 = vpop.f32.mrb[0].mxu0
    %v2155 = vadd.f32 %v2086, %v2154
    %v2156 = vpop.f32.mrb[0].mxu0
    %2157 = vdwg.mxu0
    %2158 = vst [vmem:[#allocation2] sm:$0xff] %v2155
    // Predicated region
    $region46: #{_forward_impl.1} parent=1 // pred_check
      _
    $region47: #{_forward_impl.1} parent=1 // pred_check_branch
      %2160 = sbr.rel (0) target = $region49
    $region48: #{_forward_impl.1} parent=1 // pred_region
      _
    $region49: #{_forward_impl.1} parent=1 // pred_fallthru
      _
    // Predicated region
    $region50: #{_forward_impl.1} parent=1 // pred_check
      _
    $region51: #{_forward_impl.1} parent=1 // pred_check_branch
      %2162 = sbr.rel (0) target = $region53
    $region52: #{_forward_impl.1} parent=1 // pred_region
      %s2164 = ssub.s32 128, 128
      %2165 = vsyncadd [#allocation3], %s2164
      %s2167 = sshll.u32 [#allocation2], 4
      %s2168 = int_to_ptr.vmem [resolvable:$true] %s2167
      %2170 = dma.vmem_to_hbm [thread:$0]  %s2168, 128, %s12, [#allocation3]
    $region53: #{_forward_impl.1} parent=1 // pred_fallthru
      _
    // Predicated region
    $region54: #{_forward_impl.1} parent=1 // pred_check
      _
    $region55: #{_forward_impl.1} parent=1 // pred_check_branch
      %2172 = sbr.rel (0) target = $region57
    $region56: #{_forward_impl.1} parent=1 // pred_region
      _
    $region57: #{_forward_impl.1} parent=1 // pred_fallthru
      _
    // Predicated region
    $region58: #{_forward_impl.1} parent=1 // pred_check
      _
    $region59: #{_forward_impl.1} parent=1 // pred_check_branch
      %2174 = sbr.rel (0) target = $region61
    $region60: #{_forward_impl.1} parent=1 // pred_region
      %2175 = dma.done [#allocation3], 128
    $region61: #{_forward_impl.1} parent=1 // pred_fallthru
      _
    %2176 = vsyncpa [#allocation3], 1

</llo_original>
